<compile_context>
chip_gen: v7x
topology: tpu7x:2x2x1
jax: 0.10.0
libtpu: 0.0.40
codegen_flags: <defaults>
</compile_context>

<pallas_src>
import functools

import numpy as np

import jax
import jax.numpy as jnp
from jax import lax
from jax.experimental import pallas as pl
from jax.experimental.pallas import tpu as pltpu

# ----------------------------- config ---------------------------------------
H = 32              # hidden_size
TEXT_H = 32         # text_encoder.hidden_size (forward implies == hidden_size)
VOCAB = 50
SEQ = 8
NUM_SECTIONS = 25   # sec_struct_hidden[:25]; label dimension
NUM_SEC_NODES = 30
GRAPH_SEQ = 6
NUM_MPATHS = 8
LAMBDAS = (0.5, 0.5)
THETAS = (3.0, 2.0, 3.0)

OUT_LANES = 128           # lane width of the single fused output slab
LOSS_LANE = OUT_LANES - 1  # lane holding per-row weighted-BCE contributions


# ----------------------------- small helpers --------------------------------
def _ceil8(n):
    return ((n + 7) // 8) * 8


def _pad_rows(x, n):
    pad = n - x.shape[0]
    if pad == 0:
        return x
    return jnp.concatenate(
        [x, jnp.zeros((pad,) + x.shape[1:], x.dtype)], axis=0)


def _normal(key, shape, scale=0.02):
    return scale * jax.random.normal(key, shape, jnp.float32)


# ----------------------------- the fused Pallas kernel ----------------------
def _lesicin_fused_kernel(
    pool_ref,    # [txt_pad, txt_pad*seq]  pre-scaled block-diagonal pooling
    textx_ref,   # [txt_pad*seq, H]        token embeddings (fact ++ sec)
    node_ref,    # [sn_pad(+fact_pad), H]  token-mean node embeddings
    yw_ref,      # [2*nq, 2*sec_pad]       stacked labels ++ BCE weights
    avg_ref,     # [8, txt_pad]            row-averaging matrix (sec / fact)
    comb_ref,    # [4*sec_pad, 128]        score combine ++ loss placement
    w_ref,       # [H, 5H]  packed: [Ai | Aj | w_pool | w_node | Wz]
    b_ref,       # [2, 4H]  row0: [b_pool|b_sec|b_fact|b_z]  row1: [c_i|c_j|0]
    out_ref,     # [nq, 128]
    *, hidden, fact_pad, sec_pad, sn_pad, has_struct):
    f32 = jnp.float32
    h = hidden

    # -------- packed parameter slabs (static ref views, no runtime math) ----
    w_aij = w_ref[:, 0:2 * h]            # folded intra|inter context proj
    w_pool = w_ref[:, 2 * h:3 * h]
    w_node = w_ref[:, 3 * h:4 * h]
    w_z = w_ref[:, 4 * h:5 * h]          # folded match_ctx + match linear
    b_pool = b_ref[0:1, 0:h]
    b_sec = b_ref[0:1, h:2 * h]          # g_node_b + sec_edge_glob
    b_fact = b_ref[0:1, 2 * h:3 * h]     # g_node_b + fact_edge_glob
    b_z = b_ref[0:1, 3 * h:4 * h]
    c_pair = b_ref[1:2, 0:2 * h]         # [c_intra | c_inter]

    # -------- text encoder: pooling as one MXU contraction + tanh(linear) ---
    pooled = jnp.dot(pool_ref[...], textx_ref[...],
                     preferred_element_type=f32)                 # [txt_pad, H]
    attr_all = jnp.tanh(
        jnp.dot(pooled, w_pool, preferred_element_type=f32) + b_pool)

    # -------- graph-encoder global contexts (intra/inter folded into Aij) ---
    # (torch .repeat(num_mpaths, 1) + metapath mean is an identity: elided.)
    pair = jnp.maximum(
        jnp.dot(attr_all, w_aij, preferred_element_type=f32) + c_pair, 0.0)
    g_ctx = pair[:, 0:h] + pair[:, h:2 * h]                      # [txt_pad, H]
    ctx_glob = jnp.dot(avg_ref[...], g_ctx,
                       preferred_element_type=f32)               # [8, H]

    # -------- section structural embeddings ---------------------------------
    sec_emb = node_ref[0:sn_pad, :]
    sec_struct = jnp.maximum(
        jnp.dot(sec_emb, w_node, preferred_element_type=f32)
        + b_sec + ctx_glob[0:1, :], 0.0)                         # [sn_pad, H]
    sec_key = sec_struct[0:sec_pad, :]

    fact_attr = attr_all[0:fact_pad, :]
    sec_attr = attr_all[fact_pad:fact_pad + sec_pad, :]

    if has_struct:
        fact_emb = node_ref[sn_pad:sn_pad + fact_pad, :]
        fact_struct = jnp.maximum(
            jnp.dot(fact_emb, w_node, preferred_element_type=f32)
            + b_fact + ctx_glob[1:2, :], 0.0)                    # [fact_pad, H]
        q = jnp.concatenate([fact_attr, fact_struct], axis=0)    # [2fp, H]
    else:
        q = fact_attr                                            # [fp, H]
    nq = q.shape[0]

    # -------- match network: one projection, one fused logits matmul --------
    z = jnp.dot(q, w_z, preferred_element_type=f32) + b_z
    rhs = jnp.concatenate([sec_attr, sec_key], axis=0)           # [2sp, H]
    dn = (((1,), (1,)), ((), ()))
    logits = lax.dot_general(z, rhs, dn,
                             preferred_element_type=f32)         # [nq, 2sp]

    # -------- sigmoid scores + weighted BCE-with-logits (shared exp) --------
    y = yw_ref[0:nq, :]
    wb = yw_ref[nq:2 * nq, :]
    e = jnp.exp(-jnp.abs(logits))
    sig = jnp.where(logits >= 0.0, 1.0 / (1.0 + e), e / (1.0 + e))
    # TODO(synk): jnp.log1p(e) is numerically preferable if supported.
    bce = jnp.maximum(logits, 0.0) - logits * y + jnp.log(1.0 + e)

    # -------- single lane-dense output slab ----------------------------------
    # lanes [0, sec_pad): lambda0*sig(attr) + lambda1*sig(align)
    # lane  127          : per-row sum of theta-weighted, validity-masked BCE
    sp2 = 2 * sec_pad
    out = (jnp.dot(sig, comb_ref[0:sp2, :], preferred_element_type=f32)
           + jnp.dot(bce * wb, comb_ref[sp2:2 * sp2, :],
                     preferred_element_type=f32))
    out_ref[...] = out


# ----------------------------- synthetic sub-modules -------------------------
class SynthTextEncoder:
    """Embedding -> masked mean pool -> tanh(linear).

    The embedding gather runs as XLA glue; pooling + linear are inlined into
    the fused forward kernel.
    """

    def __init__(self, key):
        self.hidden_size = TEXT_H
        k1, k2 = jax.random.split(key, 2)
        self.emb = _normal(k1, (VOCAB, TEXT_H))
        self.w_pool = _normal(k2, (TEXT_H, TEXT_H))
        self.b_pool = jnp.zeros((1, TEXT_H), jnp.float32)

    def embed(self, ids):
        return jnp.take(self.emb, ids, axis=0)


class SynthGraphEncoder:
    """Token-pooled node embeddings fused with intra/inter metapath contexts.

    struct = relu(node_emb @ w_node + b_node + ctx_glob + edge_glob), where
    ctx_glob = mean_rows(relu(intra_ctx @ Wi + bi) + relu(inter_ctx @ Wj + bj)).
    """

    def __init__(self, key):
        k1, k2, k3, k4 = jax.random.split(key, 4)
        self.emb = _normal(k1, (VOCAB, H))
        self.w_ctx_intra = _normal(k2, (2 * H, H))
        self.w_ctx_inter = _normal(k3, (2 * H, H))
        self.b_ctx_intra = jnp.zeros((1, H), jnp.float32)
        self.b_ctx_inter = jnp.zeros((1, H), jnp.float32)
        self.w_node = _normal(k4, (H, H))
        self.b_node = jnp.zeros((1, H), jnp.float32)

    def embed(self, ids):
        return jnp.take(self.emb, ids, axis=0)


class SynthMatchNetwork:
    """Bilinear matching: logits = ((q + ctx) @ W + b) @ key^T, scores = sigmoid."""

    def __init__(self, key):
        self.w = _normal(key, (H, H))
        self.b = jnp.zeros((1, H), jnp.float32)


# ----------------------------- main model ------------------------------------
class LeSICiNBertForTextClassification:
    def __init__(self, text_encoder, graph_encoder, match_network, hidden_size,
                 label_weights=None, schemas=None, sec_schemas=None,
                 lambdas=(0.5, 0.5), thetas=(3, 2, 3), num_mpaths=8, drop=0.1,
                 key=None):
        key = jax.random.PRNGKey(42) if key is None else key
        k1, k2, k3, k4 = jax.random.split(key, 4)
        self.text_encoder = text_encoder
        self.graph_encoder = graph_encoder
        self.match_network = match_network
        self.hidden_size = hidden_size
        h = hidden_size
        # post_encoder is defined by the reference but never used in forward().
        self.post_w = _normal(k1, (text_encoder.hidden_size, h))
        self.post_b = jnp.zeros((1, h), jnp.float32)
        self.match_ctx_w = _normal(k2, (h, h))
        self.match_ctx_b = jnp.zeros((1, h), jnp.float32)
        self.intra_w = _normal(k3, (h, 2 * h))
        self.intra_b = jnp.zeros((1, 2 * h), jnp.float32)
        self.inter_w = _normal(k4, (h, 2 * h))
        self.inter_b = jnp.zeros((1, 2 * h), jnp.float32)
        self.lambdas = tuple(float(v) for v in lambdas)
        self.thetas = tuple(float(v) for v in thetas)
        self.num_mpaths = num_mpaths   # repeat-by-mpaths is a no-op in kernel
        self.schemas = schemas
        self.sec_schemas = sec_schemas
        # nn.Dropout(drop): eval-mode identity in this deterministic forward.

        te, ge, mn = text_encoder, graph_encoder, match_network
        # ---- algebraic parameter folds (done once, at init) -----------------
        # match_context + match linear:  (q + q@mc_w + mc_b)@m_w + m_b
        eye = jnp.eye(h, dtype=jnp.float32)
        self.w_z = (eye + self.match_ctx_w) @ mn.w
        self.b_z = self.match_ctx_b @ mn.w + mn.b
        # model intra/inter transforms folded through graph ctx projections
        a_i = self.intra_w @ ge.w_ctx_intra                        # [H, H]
        a_j = self.inter_w @ ge.w_ctx_inter                        # [H, H]
        c_i = self.intra_b @ ge.w_ctx_intra + ge.b_ctx_intra       # [1, H]
        c_j = self.inter_b @ ge.w_ctx_inter + ge.b_ctx_inter       # [1, H]
        self.c_pair = jnp.concatenate([c_i, c_j], axis=1)          # [1, 2H]
        # one lane-packed weight slab: [Ai | Aj | w_pool | w_node | Wz]
        self.w_slab = jnp.concatenate(
            [a_i, a_j, te.w_pool, ge.w_node, self.w_z], axis=1)    # [H, 5H]

    def __call__(self, ids=None, input_ids=None, attention_mask=None,
                 global_attention_mask=None, labels=None, node_input_ids=None,
                 edge_input_ids=None, sec_ids=None, sec_input_ids=None,
                 sec_attention_mask=None, global_sec_attention_mask=None,
                 sec_node_input_ids=None, sec_edge_input_ids=None):
        f32 = jnp.float32
        h = self.hidden_size
        n_fact, seq = input_ids.shape
        n_sections = labels.shape[-1]          # reference hard-codes [:25]
        n_sec_rows = sec_input_ids.shape[0]

        fact_pad = _ceil8(n_fact)
        sec_pad = max(_ceil8(n_sec_rows), _ceil8(n_sections))
        assert sec_pad < OUT_LANES, "sec_pad must leave room for the loss lane"
        txt_pad = fact_pad + sec_pad
        nt = txt_pad * seq

        te, ge = self.text_encoder, self.graph_encoder

        # ---- text embeddings + pre-scaled block-diagonal pooling matrix -----
        text_x = jnp.concatenate(
            [_pad_rows(te.embed(input_ids), fact_pad),
             _pad_rows(te.embed(sec_input_ids), sec_pad)], axis=0
        ).reshape(nt, h)
        mask = jnp.concatenate(
            [_pad_rows(attention_mask.astype(f32), fact_pad),
             _pad_rows(sec_attention_mask.astype(f32), sec_pad)], axis=0)
        # NOTE: max(den, 1) matches a 0/1 mask; would differ from clamp(eps)
        # only for fractional attention masks.
        den = jnp.maximum(jnp.sum(mask, axis=1, keepdims=True), 1.0)
        scaled = (mask / den).reshape(1, nt)
        sel = np.zeros((txt_pad, nt), np.float32)       # static selection
        for r in range(txt_pad):
            sel[r, r * seq:(r + 1) * seq] = 1.0
        pool_mat = jnp.asarray(sel) * scaled            # [txt_pad, nt]

        # ---- graph node / edge token pooling (hoisted to XLA wrapper) -------
        sec_node_emb = jnp.mean(ge.embed(sec_node_input_ids), axis=1)
        sn_pad = max(_ceil8(sec_node_emb.shape[0]), sec_pad)
        sec_node_emb = _pad_rows(sec_node_emb, sn_pad)
        sec_edge_glob = jnp.mean(ge.embed(sec_edge_input_ids),
                                 axis=(0, 1)).reshape(1, h)

        has_struct = node_input_ids is not None
        if has_struct:
            fact_node_emb = _pad_rows(
                jnp.mean(ge.embed(node_input_ids), axis=1), fact_pad)
            fact_edge_glob = jnp.mean(ge.embed(edge_input_ids),
                                      axis=(0, 1)).reshape(1, h)
            node_emb = jnp.concatenate([sec_node_emb, fact_node_emb], axis=0)
            nq = 2 * fact_pad
        else:
            fact_edge_glob = jnp.zeros((1, h), f32)
            node_emb = sec_node_emb
            nq = fact_pad

        # ---- packed bias slab ------------------------------------------------
        b_row0 = jnp.concatenate(
            [te.b_pool, ge.b_node + sec_edge_glob,
             ge.b_node + fact_edge_glob, self.b_z], axis=1)        # [1, 4H]
        b_row1 = jnp.concatenate(
            [self.c_pair, jnp.zeros((1, 2 * h), f32)], axis=1)     # [1, 4H]
        bias_slab = jnp.concatenate([b_row0, b_row1], axis=0)      # [2, 4H]

        # ---- stacked labels + BCE quadrant weights (theta*valid/N) ----------
        sp2 = 2 * sec_pad
        denom = float(n_fact * n_sections)
        lab = labels.astype(f32)
        y_big = jnp.zeros((nq, sp2), f32)
        y_big = y_big.at[:n_fact, :n_sections].set(lab)                   # attr
        y_big = y_big.at[:n_fact, sec_pad:sec_pad + n_sections].set(lab)  # align
        wbce = np.zeros((nq, sp2), np.float32)
        wbce[:n_fact, :n_sections] = self.thetas[0] / denom
        wbce[:n_fact, sec_pad:sec_pad + n_sections] = self.thetas[2] / denom
        if has_struct:
            y_big = y_big.at[fact_pad:fact_pad + n_fact,
                             sec_pad:sec_pad + n_sections].set(lab)       # struct
            wbce[fact_pad:fact_pad + n_fact,
                 sec_pad:sec_pad + n_sections] = self.thetas[1] / denom
        yw = jnp.concatenate([y_big, jnp.asarray(wbce)], axis=0)   # [2*nq, 2sp]

        # ---- static row-averaging + score/loss combine matrices -------------
        avg = np.zeros((8, txt_pad), np.float32)
        avg[0, fact_pad:fact_pad + n_sections] = 1.0 / n_sections
        avg[1, :n_fact] = 1.0 / n_fact
        comb = np.zeros((2 * sp2, OUT_LANES), np.float32)
        for j in range(sec_pad):
            comb[j, j] = self.lambdas[0]
            comb[sec_pad + j, j] = self.lambdas[-1]
        comb[sp2:2 * sp2, LOSS_LANE] = 1.0

        # ---- ONE fused kernel launch ----------------------------------------
        kernel = functools.partial(
            _lesicin_fused_kernel, hidden=h, fact_pad=fact_pad,
            sec_pad=sec_pad, sn_pad=sn_pad, has_struct=has_struct)
        vmem = pl.BlockSpec(memory_space=pltpu.MemorySpace.VMEM)
        args = (pool_mat, text_x, node_emb, yw, jnp.asarray(avg),
                jnp.asarray(comb), self.w_slab, bias_slab)
        out = pl.pallas_call(
            kernel,
            out_shape=jax.ShapeDtypeStruct((nq, OUT_LANES), f32),
            in_specs=[vmem] * len(args),
            out_specs=vmem,
        )(*args)

        # NOTE: the reference returns scores in the `logits` field
        # (TextClassifierOutput(loss=loss, logits=scores)); we match that.
        scores = out[:n_fact, :n_sections]
        loss = jnp.sum(out[:, LOSS_LANE])
        return {"loss": loss, "logits": scores, "hidden_states": None}


# ----------------------------- demo ------------------------------------------
if __name__ == "__main__":
    root = jax.random.PRNGKey(0)
    (k_te, k_ge, k_mn, k_mod, k_ids, k_sids, k_nids, k_eids, k_snids, k_seids,
     k_lab) = jax.random.split(root, 11)

    text_encoder = SynthTextEncoder(k_te)
    graph_encoder = SynthGraphEncoder(k_ge)
    match_network = SynthMatchNetwork(k_mn)
    model = LeSICiNBertForTextClassification(
        text_encoder, graph_encoder, match_network, hidden_size=H,
        lambdas=LAMBDAS, thetas=THETAS, num_mpaths=NUM_MPATHS, key=k_mod)

    B = 2
    input_ids = jax.random.randint(k_ids, (B, SEQ), 0, VOCAB, jnp.int32)
    attention_mask = jnp.ones((B, SEQ), jnp.float32)
    global_attention_mask = jnp.zeros((B, SEQ), jnp.float32).at[:, 0].set(1.0)

    sec_input_ids = jax.random.randint(k_sids, (NUM_SECTIONS, SEQ), 0, VOCAB,
                                       jnp.int32)
    sec_attention_mask = jnp.ones((NUM_SECTIONS, SEQ), jnp.float32)
    global_sec_attention_mask = jnp.zeros((NUM_SECTIONS, SEQ),
                                          jnp.float32).at[:, 0].set(1.0)

    node_input_ids = jax.random.randint(k_nids, (B, GRAPH_SEQ), 0, VOCAB,
                                        jnp.int32)
    edge_input_ids = jax.random.randint(k_eids, (5, GRAPH_SEQ), 0, VOCAB,
                                        jnp.int32)
    sec_node_input_ids = jax.random.randint(k_snids, (NUM_SEC_NODES, GRAPH_SEQ),
                                            0, VOCAB, jnp.int32)
    sec_edge_input_ids = jax.random.randint(k_seids, (7, GRAPH_SEQ), 0, VOCAB,
                                            jnp.int32)
    labels = jax.random.bernoulli(k_lab, 0.3, (B, NUM_SECTIONS)).astype(
        jnp.float32)

    @jax.jit
    def forward(input_ids, attention_mask, global_attention_mask, labels,
                node_input_ids, edge_input_ids, sec_input_ids,
                sec_attention_mask, global_sec_attention_mask,
                sec_node_input_ids, sec_edge_input_ids):
        return model(
            ids=None, input_ids=input_ids, attention_mask=attention_mask,
            global_attention_mask=global_attention_mask, labels=labels,
            node_input_ids=node_input_ids, edge_input_ids=edge_input_ids,
            sec_ids=None, sec_input_ids=sec_input_ids,
            sec_attention_mask=sec_attention_mask,
            global_sec_attention_mask=global_sec_attention_mask,
            sec_node_input_ids=sec_node_input_ids,
            sec_edge_input_ids=sec_edge_input_ids)

    out = forward(input_ids, attention_mask, global_attention_mask, labels,
                  node_input_ids, edge_input_ids, sec_input_ids,
                  sec_attention_mask, global_sec_attention_mask,
                  sec_node_input_ids, sec_edge_input_ids)

    loss = jax.block_until_ready(out["loss"])
    logits = jax.block_until_ready(out["logits"])

    assert logits.shape == (B, NUM_SECTIONS), logits.shape
    assert bool(jnp.isfinite(loss)), loss
    assert bool(jnp.all(jnp.isfinite(logits)))
    print("KERNEL_OK")
</pallas_src>

<mosaic_0001>
module attributes {stable_mosaic.version = 11 : i64} {
  func.func @_lesicin_fused_kernel(%arg0: memref<40x320xf32, #tpu.memory_space<vmem>>, %arg1: memref<320x32xf32, #tpu.memory_space<vmem>>, %arg2: memref<40x32xf32, #tpu.memory_space<vmem>>, %arg3: memref<32x64xf32, #tpu.memory_space<vmem>>, %arg4: memref<8x40xf32, #tpu.memory_space<vmem>>, %arg5: memref<128x128xf32, #tpu.memory_space<vmem>>, %arg6: memref<32x160xf32, #tpu.memory_space<vmem>>, %arg7: memref<2x128xf32, #tpu.memory_space<vmem>>, %arg8: memref<16x128xf32, #tpu.memory_space<vmem>>) attributes {dimension_semantics = [], scalar_prefetch = 0 : i64, scratch_operands = 0 : i64, tpu.core_type = #tpu.core_type<tc>} {
    %c0 = arith.constant 0 : index
    %c0_0 = arith.constant 0 : index
    %0 = vector.load %arg6[%c0, %c0_0] : memref<32x160xf32, #tpu.memory_space<vmem>>, vector<32x64xf32>
    %c0_1 = arith.constant 0 : index
    %c64 = arith.constant 64 : index
    %1 = vector.load %arg6[%c0_1, %c64] : memref<32x160xf32, #tpu.memory_space<vmem>>, vector<32x32xf32>
    %c0_2 = arith.constant 0 : index
    %c96 = arith.constant 96 : index
    %2 = vector.load %arg6[%c0_2, %c96] : memref<32x160xf32, #tpu.memory_space<vmem>>, vector<32x32xf32>
    %c0_3 = arith.constant 0 : index
    %c128 = arith.constant 128 : index
    %3 = vector.load %arg6[%c0_3, %c128] : memref<32x160xf32, #tpu.memory_space<vmem>>, vector<32x32xf32>
    %c0_4 = arith.constant 0 : index
    %c0_5 = arith.constant 0 : index
    %4 = vector.load %arg7[%c0_4, %c0_5] : memref<2x128xf32, #tpu.memory_space<vmem>>, vector<1x32xf32>
    %c0_6 = arith.constant 0 : index
    %c32 = arith.constant 32 : index
    %5 = vector.load %arg7[%c0_6, %c32] : memref<2x128xf32, #tpu.memory_space<vmem>>, vector<1x32xf32>
    %c0_7 = arith.constant 0 : index
    %c64_8 = arith.constant 64 : index
    %6 = vector.load %arg7[%c0_7, %c64_8] : memref<2x128xf32, #tpu.memory_space<vmem>>, vector<1x32xf32>
    %c0_9 = arith.constant 0 : index
    %c96_10 = arith.constant 96 : index
    %7 = vector.load %arg7[%c0_9, %c96_10] : memref<2x128xf32, #tpu.memory_space<vmem>>, vector<1x32xf32>
    %c1 = arith.constant 1 : index
    %c0_11 = arith.constant 0 : index
    %8 = vector.load %arg7[%c1, %c0_11] : memref<2x128xf32, #tpu.memory_space<vmem>>, vector<1x64xf32>
    %c0_12 = arith.constant 0 : index
    %c0_13 = arith.constant 0 : index
    %9 = vector.load %arg0[%c0_12, %c0_13] : memref<40x320xf32, #tpu.memory_space<vmem>>, vector<40x320xf32>
    %c0_14 = arith.constant 0 : index
    %c0_15 = arith.constant 0 : index
    %10 = vector.load %arg1[%c0_14, %c0_15] : memref<320x32xf32, #tpu.memory_space<vmem>>, vector<320x32xf32>
    %cst = arith.constant dense<0.000000e+00> : vector<40x32xf32>
    %11 = tpu.matmul %9, %10, %cst {dimension_numbers = #tpu.dot_dimension_numbers<[1], [0], [0], [1], [0, 0, 1, 1], [], []>} : vector<40x320xf32>, vector<320x32xf32>, vector<40x32xf32> -> vector<40x32xf32>
    %cst_16 = arith.constant dense<0.000000e+00> : vector<40x32xf32>
    %12 = tpu.matmul %11, %1, %cst_16 {dimension_numbers = #tpu.dot_dimension_numbers<[1], [0], [0], [1], [0, 0, 1, 1], [], []>} : vector<40x32xf32>, vector<32x32xf32>, vector<40x32xf32> -> vector<40x32xf32>
    %13 = vector.broadcast %4 : vector<1x32xf32> to vector<40x32xf32>
    %14 = arith.addf %12, %13 : vector<40x32xf32>
    %15 = math.tanh %14 : vector<40x32xf32>
    %cst_17 = arith.constant dense<0.000000e+00> : vector<40x64xf32>
    %16 = tpu.matmul %15, %0, %cst_17 {dimension_numbers = #tpu.dot_dimension_numbers<[1], [0], [0], [1], [0, 0, 1, 1], [], []>} : vector<40x32xf32>, vector<32x64xf32>, vector<40x64xf32> -> vector<40x64xf32>
    %17 = vector.broadcast %8 : vector<1x64xf32> to vector<40x64xf32>
    %18 = arith.addf %16, %17 : vector<40x64xf32>
    %cst_18 = arith.constant 0.000000e+00 : f32
    %19 = vector.broadcast %cst_18 : f32 to vector<40x64xf32>
    %20 = arith.maximumf %18, %19 : vector<40x64xf32>
    %21 = vector.extract_strided_slice %20 {offsets = [0, 0], sizes = [40, 32], strides = [1, 1]} : vector<40x64xf32> to vector<40x32xf32>
    %22 = vector.extract_strided_slice %20 {offsets = [0, 32], sizes = [40, 32], strides = [1, 1]} : vector<40x64xf32> to vector<40x32xf32>
    %23 = arith.addf %21, %22 : vector<40x32xf32>
    %c0_19 = arith.constant 0 : index
    %c0_20 = arith.constant 0 : index
    %24 = vector.load %arg4[%c0_19, %c0_20] : memref<8x40xf32, #tpu.memory_space<vmem>>, vector<8x40xf32>
    %cst_21 = arith.constant dense<0.000000e+00> : vector<8x32xf32>
    %25 = tpu.matmul %24, %23, %cst_21 {dimension_numbers = #tpu.dot_dimension_numbers<[1], [0], [0], [1], [0, 0, 1, 1], [], []>} : vector<8x40xf32>, vector<40x32xf32>, vector<8x32xf32> -> vector<8x32xf32>
    %c0_22 = arith.constant 0 : index
    %c0_23 = arith.constant 0 : index
    %26 = vector.load %arg2[%c0_22, %c0_23] : memref<40x32xf32, #tpu.memory_space<vmem>>, vector<32x32xf32>
    %cst_24 = arith.constant dense<0.000000e+00> : vector<32x32xf32>
    %27 = tpu.matmul %26, %2, %cst_24 {dimension_numbers = #tpu.dot_dimension_numbers<[1], [0], [0], [1], [0, 0, 1, 1], [], []>} : vector<32x32xf32>, vector<32x32xf32>, vector<32x32xf32> -> vector<32x32xf32>
    %28 = vector.broadcast %5 : vector<1x32xf32> to vector<32x32xf32>
    %29 = arith.addf %27, %28 : vector<32x32xf32>
    %30 = vector.extract_strided_slice %25 {offsets = [0, 0], sizes = [1, 32], strides = [1, 1]} : vector<8x32xf32> to vector<1x32xf32>
    %31 = vector.broadcast %30 : vector<1x32xf32> to vector<32x32xf32>
    %32 = arith.addf %29, %31 : vector<32x32xf32>
    %cst_25 = arith.constant 0.000000e+00 : f32
    %33 = vector.broadcast %cst_25 : f32 to vector<32x32xf32>
    %34 = arith.maximumf %32, %33 : vector<32x32xf32>
    %35 = vector.extract_strided_slice %15 {offsets = [0, 0], sizes = [8, 32], strides = [1, 1]} : vector<40x32xf32> to vector<8x32xf32>
    %36 = vector.extract_strided_slice %15 {offsets = [8, 0], sizes = [32, 32], strides = [1, 1]} : vector<40x32xf32> to vector<32x32xf32>
    %c32_26 = arith.constant 32 : index
    %c0_27 = arith.constant 0 : index
    %37 = vector.load %arg2[%c32_26, %c0_27] : memref<40x32xf32, #tpu.memory_space<vmem>>, vector<8x32xf32>
    %cst_28 = arith.constant dense<0.000000e+00> : vector<8x32xf32>
    %38 = tpu.matmul %37, %2, %cst_28 {dimension_numbers = #tpu.dot_dimension_numbers<[1], [0], [0], [1], [0, 0, 1, 1], [], []>} : vector<8x32xf32>, vector<32x32xf32>, vector<8x32xf32> -> vector<8x32xf32>
    %39 = vector.broadcast %6 : vector<1x32xf32> to vector<8x32xf32>
    %40 = arith.addf %38, %39 : vector<8x32xf32>
    %41 = vector.extract_strided_slice %25 {offsets = [1, 0], sizes = [1, 32], strides = [1, 1]} : vector<8x32xf32> to vector<1x32xf32>
    %42 = vector.broadcast %41 : vector<1x32xf32> to vector<8x32xf32>
    %43 = arith.addf %40, %42 : vector<8x32xf32>
    %cst_29 = arith.constant 0.000000e+00 : f32
    %44 = vector.broadcast %cst_29 : f32 to vector<8x32xf32>
    %45 = arith.maximumf %43, %44 : vector<8x32xf32>
    %46 = tpu.concatenate %35, %45 in 0 : vector<8x32xf32>, vector<8x32xf32> -> vector<16x32xf32>
    %cst_30 = arith.constant dense<0.000000e+00> : vector<16x32xf32>
    %47 = tpu.matmul %46, %3, %cst_30 {dimension_numbers = #tpu.dot_dimension_numbers<[1], [0], [0], [1], [0, 0, 1, 1], [], []>} : vector<16x32xf32>, vector<32x32xf32>, vector<16x32xf32> -> vector<16x32xf32>
    %48 = vector.broadcast %7 : vector<1x32xf32> to vector<16x32xf32>
    %49 = arith.addf %47, %48 : vector<16x32xf32>
    %50 = tpu.concatenate %36, %34 in 0 : vector<32x32xf32>, vector<32x32xf32> -> vector<64x32xf32>
    %cst_31 = arith.constant dense<0.000000e+00> : vector<16x64xf32>
    %51 = tpu.matmul %49, %50, %cst_31 {dimension_numbers = #tpu.dot_dimension_numbers<[1], [1], [0], [0], [0, 0, 1, 0], [], []>} : vector<16x32xf32>, vector<64x32xf32>, vector<16x64xf32> -> vector<16x64xf32>
    %c0_32 = arith.constant 0 : index
    %c0_33 = arith.constant 0 : index
    %52 = vector.load %arg3[%c0_32, %c0_33] : memref<32x64xf32, #tpu.memory_space<vmem>>, vector<16x64xf32>
    %c16 = arith.constant 16 : index
    %c0_34 = arith.constant 0 : index
    %53 = vector.load %arg3[%c16, %c0_34] : memref<32x64xf32, #tpu.memory_space<vmem>>, vector<16x64xf32>
    %54 = math.absf %51 : vector<16x64xf32>
    %cst_35 = arith.constant 0.000000e+00 : f32
    %55 = vector.broadcast %cst_35 : f32 to vector<16x64xf32>
    %56 = arith.subf %55, %54 : vector<16x64xf32>
    %57 = math.exp %56 : vector<16x64xf32>
    %cst_36 = arith.constant 0.000000e+00 : f32
    %58 = vector.broadcast %cst_36 : f32 to vector<16x64xf32>
    %59 = arith.cmpf oge, %51, %58 : vector<16x64xf32>
    %cst_37 = arith.constant 1.000000e+00 : f32
    %60 = vector.broadcast %cst_37 : f32 to vector<16x64xf32>
    %61 = arith.addf %60, %57 : vector<16x64xf32>
    %cst_38 = arith.constant 1.000000e+00 : f32
    %62 = vector.broadcast %cst_38 : f32 to vector<16x64xf32>
    %63 = arith.divf %62, %61 : vector<16x64xf32>
    %cst_39 = arith.constant 1.000000e+00 : f32
    %64 = vector.broadcast %cst_39 : f32 to vector<16x64xf32>
    %65 = arith.addf %64, %57 : vector<16x64xf32>
    %66 = arith.divf %57, %65 : vector<16x64xf32>
    %67 = arith.select %59, %63, %66 : vector<16x64xi1>, vector<16x64xf32>
    %cst_40 = arith.constant 0.000000e+00 : f32
    %68 = vector.broadcast %cst_40 : f32 to vector<16x64xf32>
    %69 = arith.maximumf %51, %68 : vector<16x64xf32>
    %70 = arith.mulf %51, %52 : vector<16x64xf32>
    %71 = arith.subf %69, %70 : vector<16x64xf32>
    %cst_41 = arith.constant 1.000000e+00 : f32
    %72 = vector.broadcast %cst_41 : f32 to vector<16x64xf32>
    %73 = arith.addf %72, %57 : vector<16x64xf32>
    %74 = math.log %73 : vector<16x64xf32>
    %75 = arith.addf %71, %74 : vector<16x64xf32>
    %c0_42 = arith.constant 0 : index
    %c0_43 = arith.constant 0 : index
    %76 = vector.load %arg5[%c0_42, %c0_43] : memref<128x128xf32, #tpu.memory_space<vmem>>, vector<64x128xf32>
    %cst_44 = arith.constant dense<0.000000e+00> : vector<16x128xf32>
    %77 = tpu.matmul %67, %76, %cst_44 {dimension_numbers = #tpu.dot_dimension_numbers<[1], [0], [0], [1], [0, 0, 1, 1], [], []>} : vector<16x64xf32>, vector<64x128xf32>, vector<16x128xf32> -> vector<16x128xf32>
    %78 = arith.mulf %75, %53 : vector<16x64xf32>
    %c64_45 = arith.constant 64 : index
    %c0_46 = arith.constant 0 : index
    %79 = vector.load %arg5[%c64_45, %c0_46] : memref<128x128xf32, #tpu.memory_space<vmem>>, vector<64x128xf32>
    %cst_47 = arith.constant dense<0.000000e+00> : vector<16x128xf32>
    %80 = tpu.matmul %78, %79, %cst_47 {dimension_numbers = #tpu.dot_dimension_numbers<[1], [0], [0], [1], [0, 0, 1, 1], [], []>} : vector<16x64xf32>, vector<64x128xf32>, vector<16x128xf32> -> vector<16x128xf32>
    %81 = arith.addf %77, %80 : vector<16x128xf32>
    %c0_48 = arith.constant 0 : index
    %c0_49 = arith.constant 0 : index
    %82 = vector.load %arg8[%c0_48, %c0_49] : memref<16x128xf32, #tpu.memory_space<vmem>>, vector<16x128xf32>
    tpu.vector_store %arg8[%c0_48, %c0_49], %81 {strides = array<i32>} : memref<16x128xf32, #tpu.memory_space<vmem>>, vector<16x128xf32>,
    return
  }
}

</mosaic_0001>

<llo_original>
// kernel: forward.1
$region0: #{forward.1}
  #allocation0 [shape = 'u32[]', space=smem, size = 0x4, offset = 0x4, fixed_abs, tag = 'smem constant byte address 0x4 - core index']
  #allocation1 [shape = 'u32[144,128]{1,0:T(1,128)}', space=vmem, size = 0x12000, scoped, tag = 'internal scratch']
  %s0 = inlined_call_operand.vmem [shape: f32[40,320], index: 0, kind: input, shape index: {}]
  %s1 = inlined_call_operand.vmem [shape: f32[320,32], index: 1, kind: input, shape index: {}]
  %s2 = inlined_call_operand.vmem [shape: f32[40,32], index: 2, kind: input, shape index: {}]
  %s3 = inlined_call_operand.vmem [shape: f32[32,64], index: 3, kind: input, shape index: {}]
  %s4 = inlined_call_operand.vmem [shape: f32[8,40], index: 4, kind: input, shape index: {}]
  %s5 = inlined_call_operand.vmem [shape: f32[128,128], index: 5, kind: input, shape index: {}]
  %s6 = inlined_call_operand.vmem [shape: f32[32,160], index: 6, kind: input, shape index: {}]
  %s7 = inlined_call_operand.vmem [shape: f32[2,128], index: 7, kind: input, shape index: {}]
  %s8 = inlined_call_operand.vmem [shape: f32[16,128], index: 8, kind: output, shape index: {}]
  %s9 = sld [smem:[#allocation0]]
  $region42: #{forward.1} parent=0
    _
  %s11 = ssub.s32 1, %s9
  %s12 = scalar_select 0, %s11, %s9
  // Predicated region
  $region2: #{forward.1} parent=0 // pred_check
    _
  $region3: #{forward.1} parent=0 // pred_check_branch
    %14 = sbr.rel (0) target = $region5
  $region4: #{forward.1} parent=0 // pred_region
    _
  $region5: #{forward.1} parent=0 // pred_fallthru
    _
  // Predicated region
  $region6: #{forward.1} parent=0 // pred_check
    _
  $region7: #{forward.1} parent=0 // pred_check_branch
    %16 = sbr.rel (0) target = $region9
  $region8: #{forward.1} parent=0 // pred_region
    _
  $region9: #{forward.1} parent=0 // pred_fallthru
    _
  // Predicated region
  $region10: #{forward.1} parent=0 // pred_check
    _
  $region11: #{forward.1} parent=0 // pred_check_branch
    %18 = sbr.rel (0) target = $region13
  $region12: #{forward.1} parent=0 // pred_region
    _
  $region13: #{forward.1} parent=0 // pred_fallthru
    _
  // Predicated region
  $region14: #{forward.1} parent=0 // pred_check
    _
  $region15: #{forward.1} parent=0 // pred_check_branch
    %20 = sbr.rel (0) target = $region17
  $region16: #{forward.1} parent=0 // pred_region
    _
  $region17: #{forward.1} parent=0 // pred_fallthru
    _
  // Predicated region
  $region18: #{forward.1} parent=0 // pred_check
    _
  $region19: #{forward.1} parent=0 // pred_check_branch
    %22 = sbr.rel (0) target = $region21
  $region20: #{forward.1} parent=0 // pred_region
    _
  $region21: #{forward.1} parent=0 // pred_fallthru
    _
  // Predicated region
  $region22: #{forward.1} parent=0 // pred_check
    _
  $region23: #{forward.1} parent=0 // pred_check_branch
    %24 = sbr.rel (0) target = $region25
  $region24: #{forward.1} parent=0 // pred_region
    _
  $region25: #{forward.1} parent=0 // pred_fallthru
    _
  // Predicated region
  $region26: #{forward.1} parent=0 // pred_check
    _
  $region27: #{forward.1} parent=0 // pred_check_branch
    %26 = sbr.rel (0) target = $region29
  $region28: #{forward.1} parent=0 // pred_region
    _
  $region29: #{forward.1} parent=0 // pred_fallthru
    _
  // Predicated region
  $region30: #{forward.1} parent=0 // pred_check
    _
  $region31: #{forward.1} parent=0 // pred_check_branch
    %28 = sbr.rel (0) target = $region33
  $region32: #{forward.1} parent=0 // pred_region
    _
  $region33: #{forward.1} parent=0 // pred_fallthru
    _
  %v29 = vld [vmem:[%s6] sm:$0xff]
  %v30 = vld [vmem:[%s6 + $0x10] sm:$0xff]
  %v31 = vld [vmem:[%s6 + $0x20] sm:$0xff]
  %v32 = vld [vmem:[%s6 + $0x30] sm:$0xff]
  %v33 = vld [vmem:[%s6 + $0x8] sm:$0xff]
  %v34 = vld [vmem:[%s6 + $0x18] sm:$0xff]
  %v35 = vld [vmem:[%s6 + $0x28] sm:$0xff]
  %v36 = vld [vmem:[%s6 + $0x38] sm:$0xff]
  %v37 = vld [vmem:[%s7] sm:$0x1]
  %v38 = vld [vmem:[%s7 + $0x1] sm:$0x1]
  %v39 = vld [vmem:[%s0] sm:$0xff]
  %v40 = vld [vmem:[%s0 + $0x8] sm:$0xff]
  %v41 = vld [vmem:[%s0 + $0x10] sm:$0xff]
  %v42 = vld [vmem:[%s0 + $0x18] sm:$0xff]
  %v43 = vld [vmem:[%s0 + $0x20] sm:$0xff]
  %v44 = vld [vmem:[%s0 + $0x28] sm:$0xff]
  %v45 = vld [vmem:[%s0 + $0x30] sm:$0xff]
  %v46 = vld [vmem:[%s0 + $0x38] sm:$0xff]
  %v47 = vld [vmem:[%s0 + $0x40] sm:$0xff]
  %v48 = vld [vmem:[%s0 + $0x48] sm:$0xff]
  %v49 = vld [vmem:[%s0 + $0x50] sm:$0xff]
  %v50 = vld [vmem:[%s0 + $0x58] sm:$0xff]
  %v51 = vld [vmem:[%s0 + $0x60] sm:$0xff]
  %v52 = vld [vmem:[%s0 + $0x68] sm:$0xff]
  %v53 = vld [vmem:[%s0 + $0x70] sm:$0xff]
  %v54 = vld [vmem:[%s1] sm:$0xff]
  %v55 = vld [vmem:[%s1 + $0x8] sm:$0xff]
  %v56 = vld [vmem:[%s1 + $0x10] sm:$0xff]
  %v57 = vld [vmem:[%s1 + $0x18] sm:$0xff]
  %v58 = vld [vmem:[%s1 + $0x20] sm:$0xff]
  %v59 = vld [vmem:[%s1 + $0x28] sm:$0xff]
  %v60 = vld [vmem:[%s1 + $0x30] sm:$0xff]
  %v61 = vld [vmem:[%s1 + $0x38] sm:$0xff]
  %v62 = vld [vmem:[%s1 + $0x40] sm:$0xff]
  %v63 = vld [vmem:[%s1 + $0x48] sm:$0xff]
  %v64 = vld [vmem:[%s1 + $0x50] sm:$0xff]
  %v65 = vld [vmem:[%s1 + $0x58] sm:$0xff]
  %v66 = vld [vmem:[%s1 + $0x60] sm:$0xff]
  %v67 = vld [vmem:[%s1 + $0x68] sm:$0xff]
  %v68 = vld [vmem:[%s1 + $0x70] sm:$0xff]
  %v69 = vld [vmem:[%s1 + $0x78] sm:$0xff]
  %v70 = vld [vmem:[%s1 + $0x80] sm:$0xff]
  %v71 = vld [vmem:[%s1 + $0x88] sm:$0xff]
  %v72 = vld [vmem:[%s1 + $0x90] sm:$0xff]
  %v73 = vld [vmem:[%s1 + $0x98] sm:$0xff]
  %v74 = vld [vmem:[%s1 + $0xa0] sm:$0xff]
  %v75 = vld [vmem:[%s1 + $0xa8] sm:$0xff]
  %v76 = vld [vmem:[%s1 + $0xb0] sm:$0xff]
  %v77 = vld [vmem:[%s1 + $0xb8] sm:$0xff]
  %v78 = vld [vmem:[%s1 + $0xc0] sm:$0xff]
  %v79 = vld [vmem:[%s1 + $0xc8] sm:$0xff]
  %v80 = vld [vmem:[%s1 + $0xd0] sm:$0xff]
  %v81 = vld [vmem:[%s1 + $0xd8] sm:$0xff]
  %v82 = vld [vmem:[%s1 + $0xe0] sm:$0xff]
  %v83 = vld [vmem:[%s1 + $0xe8] sm:$0xff]
  %v84 = vld [vmem:[%s1 + $0xf0] sm:$0xff]
  %v85 = vld [vmem:[%s1 + $0xf8] sm:$0xff]
  %v86 = vld [vmem:[%s1 + $0x100] sm:$0xff]
  %v87 = vld [vmem:[%s1 + $0x108] sm:$0xff]
  %v88 = vld [vmem:[%s1 + $0x110] sm:$0xff]
  %v89 = vld [vmem:[%s1 + $0x118] sm:$0xff]
  %v90 = vld [vmem:[%s1 + $0x120] sm:$0xff]
  %v91 = vld [vmem:[%s1 + $0x128] sm:$0xff]
  %v92 = vld [vmem:[%s1 + $0x130] sm:$0xff]
  %v93 = vld [vmem:[%s1 + $0x138] sm:$0xff]
  %vm94 = vcmask 523264
  %v96 = vsel %vm94, %v41, 0
  %v99 = vsel %vm94, %v44, 0
  %v102 = vsel %vm94, %v47, 0
  %v105 = vsel %vm94, %v50, 0
  %v108 = vsel %vm94, %v53, 0
  %110 = vmatprep.subr.mxu0 0.0
  %111 = vmatpush1.msra.mxu0 %v54
  %112 = vmatprep.subr.mxu0 0.0
  %113 = vmatpush1.msra.mxu0 %v55
  %114 = vmatprep.subr.mxu0 0.0
  %115 = vmatpush1.msra.mxu0 %v56
  %116 = vmatprep.subr.mxu0 0.0
  %117 = vmatpush1.msra.mxu0 %v57
  %118 = vmatprep.subr.mxu0 0.0
  %119 = vmatpush1.msra.mxu0 %v58
  %120 = vmatprep.subr.mxu0 0.0
  %121 = vmatpush1.msra.mxu0 %v59
  %122 = vmatprep.subr.mxu0 0.0
  %123 = vmatpush1.msra.mxu0 %v60
  %124 = vmatprep.subr.mxu0 0.0
  %125 = vmatpush1.msra.mxu0 %v61
  %126 = vmatprep.subr.mxu0 0.0
  %127 = vmatpush1.msra.mxu0 %v62
  %128 = vmatprep.subr.mxu0 0.0
  %129 = vmatpush1.msra.mxu0 %v63
  %130 = vmatprep.subr.mxu0 0.0
  %131 = vmatpush1.msra.mxu0 %v64
  %132 = vmatprep.subr.mxu0 0.0
  %133 = vmatpush1.msra.mxu0 %v65
  %134 = vmatprep.subr.mxu0 0.0
  %135 = vmatpush1.msra.mxu0 %v66
  %136 = vmatprep.subr.mxu0 0.0
  %137 = vmatpush1.msra.mxu0 %v67
  %138 = vmatprep.subr.mxu0 0.0
  %139 = vmatpush1.msra.mxu0 %v68
  %140 = vmatprep.subr.mxu0 0.0
  %141 = vmatpush1.msra.mxu0 %v69
  %142 = vmatprep.subr.mxu0 0.0
  %143 = vmatpush1.msra.mxu0 %v70
  %144 = vmatprep.subr.mxu0 0.0
  %145 = vmatpush1.msra.mxu0 %v71
  %146 = vmatprep.subr.mxu0 0.0
  %147 = vmatpush1.msra.mxu0 %v72
  %148 = vmatprep.subr.mxu0 0.0
  %149 = vmatpush1.msra.mxu0 %v73
  %150 = vmatprep.subr.mxu0 0.0
  %151 = vmatpush1.msra.mxu0 %v74
  %152 = vmatprep.subr.mxu0 0.0
  %153 = vmatpush1.msra.mxu0 %v75
  %154 = vmatprep.subr.mxu0 0.0
  %155 = vmatpush1.msra.mxu0 %v76
  %156 = vmatprep.subr.mxu0 0.0
  %157 = vmatpush1.msra.mxu0 %v77
  %158 = vmatprep.subr.mxu0 0.0
  %159 = vmatpush1.msra.mxu0 %v78
  %160 = vmatprep.subr.mxu0 0.0
  %161 = vmatpush1.msra.mxu0 %v79
  %162 = vmatprep.subr.mxu0 0.0
  %163 = vmatpush1.msra.mxu0 %v80
  %164 = vmatprep.subr.mxu0 0.0
  %165 = vmatpush1.msra.mxu0 %v81
  %166 = vmatprep.subr.mxu0 0.0
  %167 = vmatpush1.msra.mxu0 %v82
  %168 = vmatprep.subr.mxu0 0.0
  %169 = vmatpush1.msra.mxu0 %v83
  %170 = vmatprep.subr.mxu0 0.0
  %171 = vmatpush1.msra.mxu0 %v84
  %172 = vmatprep.subr.mxu0 0.0
  %173 = vmatpush1.msra.mxu0 %v85
  %174 = vmatprep.mubr.f32.mxu0 %v40
  %175 = vmatmul.mubr.f32.gmra.mrb[0].mxu0 %v39
  %v176 = vpop.f32.mrb[0].mxu0
  %v177 = vadd.f32 0.0, %v176
  %v178 = vpop.f32.mrb[0].mxu0
  %179 = vmatprep.mubr.f32.mxu0 %v43
  %180 = vmatmul.mubr.f32.gmra.mrb[0].mxu0 %v42
  %v181 = vpop.f32.mrb[0].mxu0
  %v182 = vadd.f32 0.0, %v181
  %v183 = vpop.f32.mrb[0].mxu0
  %184 = vmatprep.mubr.f32.mxu0 %v46
  %185 = vmatmul.mubr.f32.gmra.mrb[0].mxu0 %v45
  %v186 = vpop.f32.mrb[0].mxu0
  %v187 = vadd.f32 0.0, %v186
  %v188 = vpop.f32.mrb[0].mxu0
  %189 = vmatprep.mubr.f32.mxu0 %v49
  %190 = vmatmul.mubr.f32.gmra.mrb[0].mxu0 %v48
  %v191 = vpop.f32.mrb[0].mxu0
  %v192 = vadd.f32 0.0, %v191
  %v193 = vpop.f32.mrb[0].mxu0
  %194 = vmatprep.mubr.f32.mxu0 %v52
  %195 = vmatmul.mubr.f32.gmra.mrb[0].mxu0 %v51
  %v196 = vpop.f32.mrb[0].mxu0
  %v197 = vadd.f32 0.0, %v196
  %v198 = vpop.f32.mrb[0].mxu0
  %199 = vdwg.mxu0
  %200 = vmatprep.subr.mxu0 0.0
  %201 = vmatpush1.msra.mxu0 %v86
  %202 = vmatprep.subr.mxu0 0.0
  %203 = vmatpush1.msra.mxu0 %v87
  %204 = vmatprep.subr.mxu0 0.0
  %205 = vmatpush1.msra.mxu0 %v88
  %206 = vmatprep.subr.mxu0 0.0
  %207 = vmatpush1.msra.mxu0 %v89
  %208 = vmatprep.subr.mxu0 0.0
  %209 = vmatpush1.msra.mxu0 %v90
  %210 = vmatprep.subr.mxu0 0.0
  %211 = vmatpush1.msra.mxu0 %v91
  %212 = vmatprep.subr.mxu0 0.0
  %213 = vmatpush1.msra.mxu0 %v92
  %214 = vmatprep.subr.mxu0 0.0
  %215 = vmatpush1.msra.mxu0 %v93
  %216 = vmatprep.subr.mxu0 0.0
  %217 = vmatpush1.msra.mxu0 0.0
  %218 = vmatprep.subr.mxu0 0.0
  %219 = vmatpush1.msra.mxu0 0.0
  %220 = vmatprep.subr.mxu0 0.0
  %221 = vmatpush1.msra.mxu0 0.0
  %222 = vmatprep.subr.mxu0 0.0
  %223 = vmatpush1.msra.mxu0 0.0
  %224 = vmatprep.subr.mxu0 0.0
  %225 = vmatpush1.msra.mxu0 0.0
  %226 = vmatprep.subr.mxu0 0.0
  %227 = vmatpush1.msra.mxu0 0.0
  %228 = vmatprep.subr.mxu0 0.0
  %229 = vmatpush1.msra.mxu0 0.0
  %230 = vmatprep.subr.mxu0 0.0
  %231 = vmatpush1.msra.mxu0 0.0
  %232 = vmatprep.subr.mxu0 0.0
  %233 = vmatpush1.msra.mxu0 0.0
  %234 = vmatprep.subr.mxu0 0.0
  %235 = vmatpush1.msra.mxu0 0.0
  %236 = vmatprep.subr.mxu0 0.0
  %237 = vmatpush1.msra.mxu0 0.0
  %238 = vmatprep.subr.mxu0 0.0
  %239 = vmatpush1.msra.mxu0 0.0
  %240 = vmatprep.subr.mxu0 0.0
  %241 = vmatpush1.msra.mxu0 0.0
  %242 = vmatprep.subr.mxu0 0.0
  %243 = vmatpush1.msra.mxu0 0.0
  %244 = vmatprep.subr.mxu0 0.0
  %245 = vmatpush1.msra.mxu0 0.0
  %246 = vmatprep.subr.mxu0 0.0
  %247 = vmatpush1.msra.mxu0 0.0
  %248 = vmatprep.subr.mxu0 0.0
  %249 = vmatpush1.msra.mxu0 0.0
  %250 = vmatprep.subr.mxu0 0.0
  %251 = vmatpush1.msra.mxu0 0.0
  %252 = vmatprep.subr.mxu0 0.0
  %253 = vmatpush1.msra.mxu0 0.0
  %254 = vmatprep.subr.mxu0 0.0
  %255 = vmatpush1.msra.mxu0 0.0
  %256 = vmatprep.subr.mxu0 0.0
  %257 = vmatpush1.msra.mxu0 0.0
  %258 = vmatprep.subr.mxu0 0.0
  %259 = vmatpush1.msra.mxu0 0.0
  %260 = vmatprep.subr.mxu0 0.0
  %261 = vmatpush1.msra.mxu0 0.0
  %262 = vmatprep.subr.mxu0 0.0
  %263 = vmatpush1.msra.mxu0 0.0
  %264 = vmatprep.mubr.f32.mxu0 0.0
  %265 = vmatmul.mubr.f32.gmra.mrb[0].mxu0 %v96
  %v266 = vpop.f32.mrb[0].mxu0
  %v267 = vadd.f32 %v177, %v266
  %v268 = vpop.f32.mrb[0].mxu0
  %269 = vmatprep.mubr.f32.mxu0 0.0
  %270 = vmatmul.mubr.f32.gmra.mrb[0].mxu0 %v99
  %v271 = vpop.f32.mrb[0].mxu0
  %v272 = vadd.f32 %v182, %v271
  %v273 = vpop.f32.mrb[0].mxu0
  %274 = vmatprep.mubr.f32.mxu0 0.0
  %275 = vmatmul.mubr.f32.gmra.mrb[0].mxu0 %v102
  %v276 = vpop.f32.mrb[0].mxu0
  %v277 = vadd.f32 %v187, %v276
  %v278 = vpop.f32.mrb[0].mxu0
  %279 = vmatprep.mubr.f32.mxu0 0.0
  %280 = vmatmul.mubr.f32.gmra.mrb[0].mxu0 %v105
  %v281 = vpop.f32.mrb[0].mxu0
  %v282 = vadd.f32 %v192, %v281
  %v283 = vpop.f32.mrb[0].mxu0
  %284 = vmatprep.mubr.f32.mxu0 0.0
  %285 = vmatmul.mubr.f32.gmra.mrb[0].mxu0 %v108
  %v286 = vpop.f32.mrb[0].mxu0
  %v287 = vadd.f32 %v197, %v286
  %v288 = vpop.f32.mrb[0].mxu0
  %289 = vdwg.mxu0
  %v290 = vlaneseq
  %v291 = vshrl.u32 %v290, 7
  %v292 = vsub.s32 0, %v291
  %v293 = vrot.slane %v37, %v292
  %298 = vrot.lane.b32.xlu0 %v29, 64
  %v299 = vpop.permute.xlu0 %298
  %300 = vrot.lane.b32.xlu0 %v30, 64
  %v301 = vpop.permute.xlu0 %300
  %302 = vrot.lane.b32.xlu0 %v31, 64
  %v303 = vpop.permute.xlu0 %302
  %304 = vrot.lane.b32.xlu0 %v32, 64
  %v305 = vpop.permute.xlu0 %304
  %vm310 = vcmask 261120
  %v312 = vsel %vm310, %v267, 0
  %v315 = vsel %vm310, %v272, 0
  %v318 = vsel %vm310, %v277, 0
  %v321 = vsel %vm310, %v282, 0
  %v324 = vsel %vm310, %v287, 0
  %326 = vmatprep.subr.mxu0 0.0
  %327 = vmatpush1.msra.mxu0 %v299
  %328 = vmatprep.subr.mxu0 0.0
  %329 = vmatpush1.msra.mxu0 %v301
  %330 = vmatprep.subr.mxu0 0.0
  %331 = vmatpush1.msra.mxu0 %v303
  %332 = vmatprep.subr.mxu0 0.0
  %333 = vmatpush1.msra.mxu0 %v305
  %334 = vmatprep.subr.mxu0 0.0
  %335 = vmatpush1.msra.mxu0 0.0
  %336 = vmatprep.subr.mxu0 0.0
  %337 = vmatpush1.msra.mxu0 0.0
  %338 = vmatprep.subr.mxu0 0.0
  %339 = vmatpush1.msra.mxu0 0.0
  %340 = vmatprep.subr.mxu0 0.0
  %341 = vmatpush1.msra.mxu0 0.0
  %342 = vmatprep.subr.mxu0 0.0
  %343 = vmatpush1.msra.mxu0 0.0
  %344 = vmatprep.subr.mxu0 0.0
  %345 = vmatpush1.msra.mxu0 0.0
  %346 = vmatprep.subr.mxu0 0.0
  %347 = vmatpush1.msra.mxu0 0.0
  %348 = vmatprep.subr.mxu0 0.0
  %349 = vmatpush1.msra.mxu0 0.0
  %350 = vmatprep.subr.mxu0 0.0
  %351 = vmatpush1.msra.mxu0 0.0
  %352 = vmatprep.subr.mxu0 0.0
  %353 = vmatpush1.msra.mxu0 0.0
  %354 = vmatprep.subr.mxu0 0.0
  %355 = vmatpush1.msra.mxu0 0.0
  %356 = vmatprep.subr.mxu0 0.0
  %357 = vmatpush1.msra.mxu0 0.0
  %358 = vmatprep.subr.mxu0 0.0
  %359 = vmatpush1.msra.mxu0 0.0
  %360 = vmatprep.subr.mxu0 0.0
  %361 = vmatpush1.msra.mxu0 0.0
  %362 = vmatprep.subr.mxu0 0.0
  %363 = vmatpush1.msra.mxu0 0.0
  %364 = vmatprep.subr.mxu0 0.0
  %365 = vmatpush1.msra.mxu0 0.0
  %366 = vmatprep.subr.mxu0 0.0
  %367 = vmatpush1.msra.mxu0 0.0
  %368 = vmatprep.subr.mxu0 0.0
  %369 = vmatpush1.msra.mxu0 0.0
  %370 = vmatprep.subr.mxu0 0.0
  %371 = vmatpush1.msra.mxu0 0.0
  %372 = vmatprep.subr.mxu0 0.0
  %373 = vmatpush1.msra.mxu0 0.0
  %374 = vmatprep.subr.mxu0 0.0
  %375 = vmatpush1.msra.mxu0 0.0
  %376 = vmatprep.subr.mxu0 0.0
  %377 = vmatpush1.msra.mxu0 0.0
  %378 = vmatprep.subr.mxu0 0.0
  %379 = vmatpush1.msra.mxu0 0.0
  %380 = vmatprep.subr.mxu0 0.0
  %381 = vmatpush1.msra.mxu0 0.0
  %382 = vmatprep.subr.mxu0 0.0
  %383 = vmatpush1.msra.mxu0 0.0
  %384 = vmatprep.subr.mxu0 0.0
  %385 = vmatpush1.msra.mxu0 0.0
  %386 = vmatprep.subr.mxu0 0.0
  %387 = vmatpush1.msra.mxu0 0.0
  %388 = vmatprep.subr.mxu0 0.0
  %389 = vmatpush1.msra.mxu0 0.0
  %390 = vmatprep.mubr.f32.mxu0 0.0
  %391 = vmatmul.mubr.f32.gmra.mrb[0].mxu0 %v312
  %v392 = vpop.f32.mrb[0].mxu0
  %v393 = vadd.f32 %v293, %v392
  %v394 = vpop.f32.mrb[0].mxu0
  %395 = vmatprep.mubr.f32.mxu0 0.0
  %396 = vmatmul.mubr.f32.gmra.mrb[0].mxu0 %v315
  %v397 = vpop.f32.mrb[0].mxu0
  %v398 = vadd.f32 %v293, %v397
  %v399 = vpop.f32.mrb[0].mxu0
  %400 = vmatprep.mubr.f32.mxu0 0.0
  %401 = vmatmul.mubr.f32.gmra.mrb[0].mxu0 %v318
  %v402 = vpop.f32.mrb[0].mxu0
  %v403 = vadd.f32 %v293, %v402
  %v404 = vpop.f32.mrb[0].mxu0
  %405 = vmatprep.mubr.f32.mxu0 0.0
  %406 = vmatmul.mubr.f32.gmra.mrb[0].mxu0 %v321
  %v407 = vpop.f32.mrb[0].mxu0
  %v408 = vadd.f32 %v293, %v407
  %v409 = vpop.f32.mrb[0].mxu0
  %410 = vmatprep.mubr.f32.mxu0 0.0
  %411 = vmatmul.mubr.f32.gmra.mrb[0].mxu0 %v324
  %v412 = vpop.f32.mrb[0].mxu0
  %v413 = vadd.f32 %v293, %v412
  %v414 = vpop.f32.mrb[0].mxu0
  %415 = vdwg.mxu0
  %v416 = vtanh.pop %v393
  %v417 = vtanh.pop %v398
  %v418 = vtanh.pop %v403
  %v419 = vtanh.pop %v408
  %v420 = vtanh.pop %v413
  %v421 = vlaneseq
  %v422 = vshrl.u32 %v421, 7
  %v423 = vsub.s32 0, %v422
  %v424 = vrot.slane %v38, %v423
  %v426 = vsel %vm310, %v416, 0
  %v429 = vsel %vm310, %v417, 0
  %v432 = vsel %vm310, %v418, 0
  %v435 = vsel %vm310, %v419, 0
  %v438 = vsel %vm310, %v420, 0
  %440 = vmatprep.subr.mxu0 0.0
  %441 = vmatpush1.msra.mxu0 %v29
  %442 = vmatprep.subr.mxu0 0.0
  %443 = vmatpush1.msra.mxu0 %v30
  %444 = vmatprep.subr.mxu0 0.0
  %445 = vmatpush1.msra.mxu0 %v31
  %446 = vmatprep.subr.mxu0 0.0
  %447 = vmatpush1.msra.mxu0 %v32
  %448 = vmatprep.subr.mxu0 0.0
  %449 = vmatpush1.msra.mxu0 0.0
  %450 = vmatprep.subr.mxu0 0.0
  %451 = vmatpush1.msra.mxu0 0.0
  %452 = vmatprep.subr.mxu0 0.0
  %453 = vmatpush1.msra.mxu0 0.0
  %454 = vmatprep.subr.mxu0 0.0
  %455 = vmatpush1.msra.mxu0 0.0
  %456 = vmatprep.subr.mxu0 0.0
  %457 = vmatpush1.msra.mxu0 0.0
  %458 = vmatprep.subr.mxu0 0.0
  %459 = vmatpush1.msra.mxu0 0.0
  %460 = vmatprep.subr.mxu0 0.0
  %461 = vmatpush1.msra.mxu0 0.0
  %462 = vmatprep.subr.mxu0 0.0
  %463 = vmatpush1.msra.mxu0 0.0
  %464 = vmatprep.subr.mxu0 0.0
  %465 = vmatpush1.msra.mxu0 0.0
  %466 = vmatprep.subr.mxu0 0.0
  %467 = vmatpush1.msra.mxu0 0.0
  %468 = vmatprep.subr.mxu0 0.0
  %469 = vmatpush1.msra.mxu0 0.0
  %470 = vmatprep.subr.mxu0 0.0
  %471 = vmatpush1.msra.mxu0 0.0
  %472 = vmatprep.subr.mxu0 0.0
  %473 = vmatpush1.msra.mxu0 0.0
  %474 = vmatprep.subr.mxu0 0.0
  %475 = vmatpush1.msra.mxu0 0.0
  %476 = vmatprep.subr.mxu0 0.0
  %477 = vmatpush1.msra.mxu0 0.0
  %478 = vmatprep.subr.mxu0 0.0
  %479 = vmatpush1.msra.mxu0 0.0
  %480 = vmatprep.subr.mxu0 0.0
  %481 = vmatpush1.msra.mxu0 0.0
  %482 = vmatprep.subr.mxu0 0.0
  %483 = vmatpush1.msra.mxu0 0.0
  %484 = vmatprep.subr.mxu0 0.0
  %485 = vmatpush1.msra.mxu0 0.0
  %486 = vmatprep.subr.mxu0 0.0
  %487 = vmatpush1.msra.mxu0 0.0
  %488 = vmatprep.subr.mxu0 0.0
  %489 = vmatpush1.msra.mxu0 0.0
  %490 = vmatprep.subr.mxu0 0.0
  %491 = vmatpush1.msra.mxu0 0.0
  %492 = vmatprep.subr.mxu0 0.0
  %493 = vmatpush1.msra.mxu0 0.0
  %494 = vmatprep.subr.mxu0 0.0
  %495 = vmatpush1.msra.mxu0 0.0
  %496 = vmatprep.subr.mxu0 0.0
  %497 = vmatpush1.msra.mxu0 0.0
  %498 = vmatprep.subr.mxu0 0.0
  %499 = vmatpush1.msra.mxu0 0.0
  %500 = vmatprep.subr.mxu0 0.0
  %501 = vmatpush1.msra.mxu0 0.0
  %502 = vmatprep.subr.mxu0 0.0
  %503 = vmatpush1.msra.mxu0 0.0
  %504 = vmatprep.mubr.f32.mxu0 0.0
  %505 = vmatmul.mubr.f32.gmra.mrb[0].mxu0 %v426
  %v506 = vpop.f32.mrb[0].mxu0
  %v507 = vadd.f32 %v424, %v506
  %v508 = vpop.f32.mrb[0].mxu0
  %509 = vmatprep.mubr.f32.mxu0 0.0
  %510 = vmatmul.mubr.f32.gmra.mrb[0].mxu0 %v429
  %v511 = vpop.f32.mrb[0].mxu0
  %v512 = vadd.f32 %v424, %v511
  %v513 = vpop.f32.mrb[0].mxu0
  %514 = vmatprep.mubr.f32.mxu0 0.0
  %515 = vmatmul.mubr.f32.gmra.mrb[0].mxu0 %v432
  %v516 = vpop.f32.mrb[0].mxu0
  %v517 = vadd.f32 %v424, %v516
  %v518 = vpop.f32.mrb[0].mxu0
  %519 = vmatprep.mubr.f32.mxu0 0.0
  %520 = vmatmul.mubr.f32.gmra.mrb[0].mxu0 %v435
  %v521 = vpop.f32.mrb[0].mxu0
  %v522 = vadd.f32 %v424, %v521
  %v523 = vpop.f32.mrb[0].mxu0
  %524 = vmatprep.mubr.f32.mxu0 0.0
  %525 = vmatmul.mubr.f32.gmra.mrb[0].mxu0 %v438
  %v526 = vpop.f32.mrb[0].mxu0
  %v527 = vadd.f32 %v424, %v526
  %v528 = vpop.f32.mrb[0].mxu0
  %529 = vdwg.mxu0
  %v530 = vmax.f32 %v507, 0.0
  %v531 = vmax.f32 %v512, 0.0
  %v532 = vmax.f32 %v517, 0.0
  %v533 = vmax.f32 %v522, 0.0
  %v534 = vmax.f32 %v527, 0.0
  %540 = vrot.lane.b32.xlu0 %v530, 96
  %v541 = vpop.permute.xlu0 %540
  %542 = vrot.lane.b32.xlu0 %v531, 96
  %v543 = vpop.permute.xlu0 %542
  %544 = vrot.lane.b32.xlu0 %v532, 96
  %v545 = vpop.permute.xlu0 %544
  %546 = vrot.lane.b32.xlu0 %v533, 96
  %v547 = vpop.permute.xlu0 %546
  %548 = vrot.lane.b32.xlu0 %v534, 96
  %v549 = vpop.permute.xlu0 %548
  %v555 = vadd.f32 %v530, %v541
  %v556 = vadd.f32 %v531, %v543
  %v557 = vadd.f32 %v532, %v545
  %v558 = vadd.f32 %v533, %v547
  %v559 = vadd.f32 %v534, %v549
  %v560 = vld [vmem:[%s4] sm:$0xff]
  %vm561 = vcmask 326656
  %v563 = vsel %vm561, %v560, 0
  %565 = vmatprep.subr.mxu0 0.0
  %566 = vmatpush1.msra.mxu0 %v555
  %567 = vmatprep.subr.mxu0 0.0
  %568 = vmatpush1.msra.mxu0 %v556
  %569 = vmatprep.subr.mxu0 0.0
  %570 = vmatpush1.msra.mxu0 %v557
  %571 = vmatprep.subr.mxu0 0.0
  %572 = vmatpush1.msra.mxu0 %v558
  %573 = vmatprep.subr.mxu0 0.0
  %574 = vmatpush1.msra.mxu0 %v559
  %575 = vmatprep.subr.mxu0 0.0
  %576 = vmatpush1.msra.mxu0 0.0
  %577 = vmatprep.subr.mxu0 0.0
  %578 = vmatpush1.msra.mxu0 0.0
  %579 = vmatprep.subr.mxu0 0.0
  %580 = vmatpush1.msra.mxu0 0.0
  %581 = vmatprep.subr.mxu0 0.0
  %582 = vmatpush1.msra.mxu0 0.0
  %583 = vmatprep.subr.mxu0 0.0
  %584 = vmatpush1.msra.mxu0 0.0
  %585 = vmatprep.subr.mxu0 0.0
  %586 = vmatpush1.msra.mxu0 0.0
  %587 = vmatprep.subr.mxu0 0.0
  %588 = vmatpush1.msra.mxu0 0.0
  %589 = vmatprep.subr.mxu0 0.0
  %590 = vmatpush1.msra.mxu0 0.0
  %591 = vmatprep.subr.mxu0 0.0
  %592 = vmatpush1.msra.mxu0 0.0
  %593 = vmatprep.subr.mxu0 0.0
  %594 = vmatpush1.msra.mxu0 0.0
  %595 = vmatprep.subr.mxu0 0.0
  %596 = vmatpush1.msra.mxu0 0.0
  %597 = vmatprep.subr.mxu0 0.0
  %598 = vmatpush1.msra.mxu0 0.0
  %599 = vmatprep.subr.mxu0 0.0
  %600 = vmatpush1.msra.mxu0 0.0
  %601 = vmatprep.subr.mxu0 0.0
  %602 = vmatpush1.msra.mxu0 0.0
  %603 = vmatprep.subr.mxu0 0.0
  %604 = vmatpush1.msra.mxu0 0.0
  %605 = vmatprep.subr.mxu0 0.0
  %606 = vmatpush1.msra.mxu0 0.0
  %607 = vmatprep.subr.mxu0 0.0
  %608 = vmatpush1.msra.mxu0 0.0
  %609 = vmatprep.subr.mxu0 0.0
  %610 = vmatpush1.msra.mxu0 0.0
  %611 = vmatprep.subr.mxu0 0.0
  %612 = vmatpush1.msra.mxu0 0.0
  %613 = vmatprep.subr.mxu0 0.0
  %614 = vmatpush1.msra.mxu0 0.0
  %615 = vmatprep.subr.mxu0 0.0
  %616 = vmatpush1.msra.mxu0 0.0
  %617 = vmatprep.subr.mxu0 0.0
  %618 = vmatpush1.msra.mxu0 0.0
  %619 = vmatprep.subr.mxu0 0.0
  %620 = vmatpush1.msra.mxu0 0.0
  %621 = vmatprep.subr.mxu0 0.0
  %622 = vmatpush1.msra.mxu0 0.0
  %623 = vmatprep.subr.mxu0 0.0
  %624 = vmatpush1.msra.mxu0 0.0
  %625 = vmatprep.subr.mxu0 0.0
  %626 = vmatpush1.msra.mxu0 0.0
  %627 = vmatprep.subr.mxu0 0.0
  %628 = vmatpush1.msra.mxu0 0.0
  %629 = vmatprep.mubr.f32.mxu0 0.0
  %630 = vmatmul.mubr.f32.gmra.mrb[0].mxu0 %v563
  %v631 = vpop.f32.mrb[0].mxu0
  %v632 = vadd.f32 0.0, %v631
  %v633 = vpop.f32.mrb[0].mxu0
  %634 = vdwg.mxu0
  %v635 = vld [vmem:[%s2] sm:$0xff]
  %v636 = vld [vmem:[%s2 + $0x8] sm:$0xff]
  %v637 = vld [vmem:[%s2 + $0x10] sm:$0xff]
  %v638 = vld [vmem:[%s2 + $0x18] sm:$0xff]
  %639 = vrot.lane.b32.xlu0 %v29, 32
  %v640 = vpop.permute.xlu0 %639
  %641 = vrot.lane.b32.xlu0 %v30, 32
  %v642 = vpop.permute.xlu0 %641
  %643 = vrot.lane.b32.xlu0 %v31, 32
  %v644 = vpop.permute.xlu0 %643
  %645 = vrot.lane.b32.xlu0 %v32, 32
  %v646 = vpop.permute.xlu0 %645
  %652 = vrot.lane.b32.xlu0 %v293, 96
  %v653 = vpop.permute.xlu0 %652
  %v656 = vsel %vm310, %v635, 0
  %v659 = vsel %vm310, %v636, 0
  %v662 = vsel %vm310, %v637, 0
  %v665 = vsel %vm310, %v638, 0
  %667 = vmatprep.subr.mxu0 0.0
  %668 = vmatpush1.msra.mxu0 %v640
  %669 = vmatprep.subr.mxu0 0.0
  %670 = vmatpush1.msra.mxu0 %v642
  %671 = vmatprep.subr.mxu0 0.0
  %672 = vmatpush1.msra.mxu0 %v644
  %673 = vmatprep.subr.mxu0 0.0
  %674 = vmatpush1.msra.mxu0 %v646
  %675 = vmatprep.subr.mxu0 0.0
  %676 = vmatpush1.msra.mxu0 0.0
  %677 = vmatprep.subr.mxu0 0.0
  %678 = vmatpush1.msra.mxu0 0.0
  %679 = vmatprep.subr.mxu0 0.0
  %680 = vmatpush1.msra.mxu0 0.0
  %681 = vmatprep.subr.mxu0 0.0
  %682 = vmatpush1.msra.mxu0 0.0
  %683 = vmatprep.subr.mxu0 0.0
  %684 = vmatpush1.msra.mxu0 0.0
  %685 = vmatprep.subr.mxu0 0.0
  %686 = vmatpush1.msra.mxu0 0.0
  %687 = vmatprep.subr.mxu0 0.0
  %688 = vmatpush1.msra.mxu0 0.0
  %689 = vmatprep.subr.mxu0 0.0
  %690 = vmatpush1.msra.mxu0 0.0
  %691 = vmatprep.subr.mxu0 0.0
  %692 = vmatpush1.msra.mxu0 0.0
  %693 = vmatprep.subr.mxu0 0.0
  %694 = vmatpush1.msra.mxu0 0.0
  %695 = vmatprep.subr.mxu0 0.0
  %696 = vmatpush1.msra.mxu0 0.0
  %697 = vmatprep.subr.mxu0 0.0
  %698 = vmatpush1.msra.mxu0 0.0
  %699 = vmatprep.subr.mxu0 0.0
  %700 = vmatpush1.msra.mxu0 0.0
  %701 = vmatprep.subr.mxu0 0.0
  %702 = vmatpush1.msra.mxu0 0.0
  %703 = vmatprep.subr.mxu0 0.0
  %704 = vmatpush1.msra.mxu0 0.0
  %705 = vmatprep.subr.mxu0 0.0
  %706 = vmatpush1.msra.mxu0 0.0
  %707 = vmatprep.subr.mxu0 0.0
  %708 = vmatpush1.msra.mxu0 0.0
  %709 = vmatprep.subr.mxu0 0.0
  %710 = vmatpush1.msra.mxu0 0.0
  %711 = vmatprep.subr.mxu0 0.0
  %712 = vmatpush1.msra.mxu0 0.0
  %713 = vmatprep.subr.mxu0 0.0
  %714 = vmatpush1.msra.mxu0 0.0
  %715 = vmatprep.subr.mxu0 0.0
  %716 = vmatpush1.msra.mxu0 0.0
  %717 = vmatprep.subr.mxu0 0.0
  %718 = vmatpush1.msra.mxu0 0.0
  %719 = vmatprep.subr.mxu0 0.0
  %720 = vmatpush1.msra.mxu0 0.0
  %721 = vmatprep.subr.mxu0 0.0
  %722 = vmatpush1.msra.mxu0 0.0
  %723 = vmatprep.subr.mxu0 0.0
  %724 = vmatpush1.msra.mxu0 0.0
  %725 = vmatprep.subr.mxu0 0.0
  %726 = vmatpush1.msra.mxu0 0.0
  %727 = vmatprep.subr.mxu0 0.0
  %728 = vmatpush1.msra.mxu0 0.0
  %729 = vmatprep.subr.mxu0 0.0
  %730 = vmatpush1.msra.mxu0 0.0
  %731 = vmatprep.mubr.f32.mxu0 0.0
  %732 = vmatmul.mubr.f32.gmra.mrb[0].mxu0 %v656
  %v733 = vpop.f32.mrb[0].mxu0
  %v734 = vadd.f32 %v653, %v733
  %v735 = vpop.f32.mrb[0].mxu0
  %736 = vmatprep.mubr.f32.mxu0 0.0
  %737 = vmatmul.mubr.f32.gmra.mrb[0].mxu0 %v659
  %v738 = vpop.f32.mrb[0].mxu0
  %v739 = vadd.f32 %v653, %v738
  %v740 = vpop.f32.mrb[0].mxu0
  %741 = vmatprep.mubr.f32.mxu0 0.0
  %742 = vmatmul.mubr.f32.gmra.mrb[0].mxu0 %v662
  %v743 = vpop.f32.mrb[0].mxu0
  %v744 = vadd.f32 %v653, %v743
  %v745 = vpop.f32.mrb[0].mxu0
  %746 = vmatprep.mubr.f32.mxu0 0.0
  %747 = vmatmul.mubr.f32.gmra.mrb[0].mxu0 %v665
  %v748 = vpop.f32.mrb[0].mxu0
  %v749 = vadd.f32 %v653, %v748
  %v750 = vpop.f32.mrb[0].mxu0
  %751 = vdwg.mxu0
  %v752 = vlaneseq
  %v753 = vshrl.u32 %v752, 7
  %v754 = vsub.s32 0, %v753
  %v755 = vrot.slane %v632, %v754
  %v756 = vadd.f32 %v734, %v755
  %v757 = vadd.f32 %v739, %v755
  %v758 = vadd.f32 %v744, %v755
  %v759 = vadd.f32 %v749, %v755
  %v760 = vmax.f32 %v756, 0.0
  %v761 = vmax.f32 %v757, 0.0
  %v762 = vmax.f32 %v758, 0.0
  %v763 = vmax.f32 %v759, 0.0
  %v764 = vld [vmem:[%s2 + $0x20] sm:$0xff]
  %765 = vrot.lane.b32.xlu0 %v293, 64
  %v766 = vpop.permute.xlu0 %765
  %v769 = vsel %vm310, %v764, 0
  %771 = vmatprep.subr.mxu0 0.0
  %772 = vmatpush1.msra.mxu0 %v640
  %773 = vmatprep.subr.mxu0 0.0
  %774 = vmatpush1.msra.mxu0 %v642
  %775 = vmatprep.subr.mxu0 0.0
  %776 = vmatpush1.msra.mxu0 %v644
  %777 = vmatprep.subr.mxu0 0.0
  %778 = vmatpush1.msra.mxu0 %v646
  %779 = vmatprep.subr.mxu0 0.0
  %780 = vmatpush1.msra.mxu0 0.0
  %781 = vmatprep.subr.mxu0 0.0
  %782 = vmatpush1.msra.mxu0 0.0
  %783 = vmatprep.subr.mxu0 0.0
  %784 = vmatpush1.msra.mxu0 0.0
  %785 = vmatprep.subr.mxu0 0.0
  %786 = vmatpush1.msra.mxu0 0.0
  %787 = vmatprep.subr.mxu0 0.0
  %788 = vmatpush1.msra.mxu0 0.0
  %789 = vmatprep.subr.mxu0 0.0
  %790 = vmatpush1.msra.mxu0 0.0
  %791 = vmatprep.subr.mxu0 0.0
  %792 = vmatpush1.msra.mxu0 0.0
  %793 = vmatprep.subr.mxu0 0.0
  %794 = vmatpush1.msra.mxu0 0.0
  %795 = vmatprep.subr.mxu0 0.0
  %796 = vmatpush1.msra.mxu0 0.0
  %797 = vmatprep.subr.mxu0 0.0
  %798 = vmatpush1.msra.mxu0 0.0
  %799 = vmatprep.subr.mxu0 0.0
  %800 = vmatpush1.msra.mxu0 0.0
  %801 = vmatprep.subr.mxu0 0.0
  %802 = vmatpush1.msra.mxu0 0.0
  %803 = vmatprep.subr.mxu0 0.0
  %804 = vmatpush1.msra.mxu0 0.0
  %805 = vmatprep.subr.mxu0 0.0
  %806 = vmatpush1.msra.mxu0 0.0
  %807 = vmatprep.subr.mxu0 0.0
  %808 = vmatpush1.msra.mxu0 0.0
  %809 = vmatprep.subr.mxu0 0.0
  %810 = vmatpush1.msra.mxu0 0.0
  %811 = vmatprep.subr.mxu0 0.0
  %812 = vmatpush1.msra.mxu0 0.0
  %813 = vmatprep.subr.mxu0 0.0
  %814 = vmatpush1.msra.mxu0 0.0
  %815 = vmatprep.subr.mxu0 0.0
  %816 = vmatpush1.msra.mxu0 0.0
  %817 = vmatprep.subr.mxu0 0.0
  %818 = vmatpush1.msra.mxu0 0.0
  %819 = vmatprep.subr.mxu0 0.0
  %820 = vmatpush1.msra.mxu0 0.0
  %821 = vmatprep.subr.mxu0 0.0
  %822 = vmatpush1.msra.mxu0 0.0
  %823 = vmatprep.subr.mxu0 0.0
  %824 = vmatpush1.msra.mxu0 0.0
  %825 = vmatprep.subr.mxu0 0.0
  %826 = vmatpush1.msra.mxu0 0.0
  %827 = vmatprep.subr.mxu0 0.0
  %828 = vmatpush1.msra.mxu0 0.0
  %829 = vmatprep.subr.mxu0 0.0
  %830 = vmatpush1.msra.mxu0 0.0
  %831 = vmatprep.subr.mxu0 0.0
  %832 = vmatpush1.msra.mxu0 0.0
  %833 = vmatprep.subr.mxu0 0.0
  %834 = vmatpush1.msra.mxu0 0.0
  %835 = vmatprep.mubr.f32.mxu0 0.0
  %836 = vmatmul.mubr.f32.gmra.mrb[0].mxu0 %v769
  %v837 = vpop.f32.mrb[0].mxu0
  %v838 = vadd.f32 %v766, %v837
  %v839 = vpop.f32.mrb[0].mxu0
  %840 = vdwg.mxu0
  %v841 = vlaneseq
  %v842 = vshrl.u32 %v841, 7
  %v843 = vsub.s32 1, %v842
  %v844 = vrot.slane %v632, %v843
  %v845 = vadd.f32 %v838, %v844
  %v846 = vmax.f32 %v845, 0.0
  %847 = vrot.lane.b32.xlu0 %v293, 32
  %v848 = vpop.permute.xlu0 %847
  %v851 = vsel %vm310, %v846, 0
  %853 = vmatprep.subr.mxu0 0.0
  %854 = vmatpush1.msra.mxu0 %v33
  %855 = vmatprep.subr.mxu0 0.0
  %856 = vmatpush1.msra.mxu0 %v34
  %857 = vmatprep.subr.mxu0 0.0
  %858 = vmatpush1.msra.mxu0 %v35
  %859 = vmatprep.subr.mxu0 0.0
  %860 = vmatpush1.msra.mxu0 %v36
  %861 = vmatprep.subr.mxu0 0.0
  %862 = vmatpush1.msra.mxu0 0.0
  %863 = vmatprep.subr.mxu0 0.0
  %864 = vmatpush1.msra.mxu0 0.0
  %865 = vmatprep.subr.mxu0 0.0
  %866 = vmatpush1.msra.mxu0 0.0
  %867 = vmatprep.subr.mxu0 0.0
  %868 = vmatpush1.msra.mxu0 0.0
  %869 = vmatprep.subr.mxu0 0.0
  %870 = vmatpush1.msra.mxu0 0.0
  %871 = vmatprep.subr.mxu0 0.0
  %872 = vmatpush1.msra.mxu0 0.0
  %873 = vmatprep.subr.mxu0 0.0
  %874 = vmatpush1.msra.mxu0 0.0
  %875 = vmatprep.subr.mxu0 0.0
  %876 = vmatpush1.msra.mxu0 0.0
  %877 = vmatprep.subr.mxu0 0.0
  %878 = vmatpush1.msra.mxu0 0.0
  %879 = vmatprep.subr.mxu0 0.0
  %880 = vmatpush1.msra.mxu0 0.0
  %881 = vmatprep.subr.mxu0 0.0
  %882 = vmatpush1.msra.mxu0 0.0
  %883 = vmatprep.subr.mxu0 0.0
  %884 = vmatpush1.msra.mxu0 0.0
  %885 = vmatprep.subr.mxu0 0.0
  %886 = vmatpush1.msra.mxu0 0.0
  %887 = vmatprep.subr.mxu0 0.0
  %888 = vmatpush1.msra.mxu0 0.0
  %889 = vmatprep.subr.mxu0 0.0
  %890 = vmatpush1.msra.mxu0 0.0
  %891 = vmatprep.subr.mxu0 0.0
  %892 = vmatpush1.msra.mxu0 0.0
  %893 = vmatprep.subr.mxu0 0.0
  %894 = vmatpush1.msra.mxu0 0.0
  %895 = vmatprep.subr.mxu0 0.0
  %896 = vmatpush1.msra.mxu0 0.0
  %897 = vmatprep.subr.mxu0 0.0
  %898 = vmatpush1.msra.mxu0 0.0
  %899 = vmatprep.subr.mxu0 0.0
  %900 = vmatpush1.msra.mxu0 0.0
  %901 = vmatprep.subr.mxu0 0.0
  %902 = vmatpush1.msra.mxu0 0.0
  %903 = vmatprep.subr.mxu0 0.0
  %904 = vmatpush1.msra.mxu0 0.0
  %905 = vmatprep.subr.mxu0 0.0
  %906 = vmatpush1.msra.mxu0 0.0
  %907 = vmatprep.subr.mxu0 0.0
  %908 = vmatpush1.msra.mxu0 0.0
  %909 = vmatprep.subr.mxu0 0.0
  %910 = vmatpush1.msra.mxu0 0.0
  %911 = vmatprep.subr.mxu0 0.0
  %912 = vmatpush1.msra.mxu0 0.0
  %913 = vmatprep.subr.mxu0 0.0
  %914 = vmatpush1.msra.mxu0 0.0
  %915 = vmatprep.subr.mxu0 0.0
  %916 = vmatpush1.msra.mxu0 0.0
  %917 = vmatprep.mubr.f32.mxu0 0.0
  %918 = vmatmul.mubr.f32.gmra.mrb[0].mxu0 %v426
  %v919 = vpop.f32.mrb[0].mxu0
  %v920 = vadd.f32 %v848, %v919
  %v921 = vpop.f32.mrb[0].mxu0
  %922 = vmatprep.mubr.f32.mxu0 0.0
  %923 = vmatmul.mubr.f32.gmra.mrb[0].mxu0 %v851
  %v924 = vpop.f32.mrb[0].mxu0
  %v925 = vadd.f32 %v848, %v924
  %v926 = vpop.f32.mrb[0].mxu0
  %927 = vdwg.mxu0
  %v929 = vsel %vm310, %v920, 0
  %v932 = vsel %vm310, %v925, 0
  %v935 = vsel %vm310, %v760, 0
  %v938 = vsel %vm310, %v761, 0
  %v941 = vsel %vm310, %v762, 0
  %v944 = vsel %vm310, %v763, 0
  %946 = vmatprep.subr.mxu0 0.0
  %947 = vmatpush1.xpose.msra.mxu0 %v429
  %948 = vmatprep.subr.mxu0 0.0
  %949 = vmatpush1.xpose.msra.mxu0 %v432
  %950 = vmatprep.subr.mxu0 0.0
  %951 = vmatpush1.xpose.msra.mxu0 %v435
  %952 = vmatprep.subr.mxu0 0.0
  %953 = vmatpush1.xpose.msra.mxu0 %v438
  %954 = vmatprep.subr.mxu0 0.0
  %955 = vmatpush1.xpose.msra.mxu0 %v935
  %956 = vmatprep.subr.mxu0 0.0
  %957 = vmatpush1.xpose.msra.mxu0 %v938
  %958 = vmatprep.subr.mxu0 0.0
  %959 = vmatpush1.xpose.msra.mxu0 %v941
  %960 = vmatprep.subr.mxu0 0.0
  %961 = vmatpush1.xpose.msra.mxu0 %v944
  %962 = vmatprep.subr.mxu0 0.0
  %963 = vmatpush1.xpose.msra.mxu0 0.0
  %964 = vmatprep.subr.mxu0 0.0
  %965 = vmatpush1.xpose.msra.mxu0 0.0
  %966 = vmatprep.subr.mxu0 0.0
  %967 = vmatpush1.xpose.msra.mxu0 0.0
  %968 = vmatprep.subr.mxu0 0.0
  %969 = vmatpush1.xpose.msra.mxu0 0.0
  %970 = vmatprep.subr.mxu0 0.0
  %971 = vmatpush1.xpose.msra.mxu0 0.0
  %972 = vmatprep.subr.mxu0 0.0
  %973 = vmatpush1.xpose.msra.mxu0 0.0
  %974 = vmatprep.subr.mxu0 0.0
  %975 = vmatpush1.xpose.msra.mxu0 0.0
  %976 = vmatprep.subr.mxu0 0.0
  %977 = vmatpush1.xpose.msra.mxu0 0.0
  %978 = vmatprep.subr.mxu0 0.0
  %979 = vmatpush1.xpose.msra.mxu0 0.0
  %980 = vmatprep.subr.mxu0 0.0
  %981 = vmatpush1.xpose.msra.mxu0 0.0
  %982 = vmatprep.subr.mxu0 0.0
  %983 = vmatpush1.xpose.msra.mxu0 0.0
  %984 = vmatprep.subr.mxu0 0.0
  %985 = vmatpush1.xpose.msra.mxu0 0.0
  %986 = vmatprep.subr.mxu0 0.0
  %987 = vmatpush1.xpose.msra.mxu0 0.0
  %988 = vmatprep.subr.mxu0 0.0
  %989 = vmatpush1.xpose.msra.mxu0 0.0
  %990 = vmatprep.subr.mxu0 0.0
  %991 = vmatpush1.xpose.msra.mxu0 0.0
  %992 = vmatprep.subr.mxu0 0.0
  %993 = vmatpush1.xpose.msra.mxu0 0.0
  %994 = vmatprep.subr.mxu0 0.0
  %995 = vmatpush1.xpose.msra.mxu0 0.0
  %996 = vmatprep.subr.mxu0 0.0
  %997 = vmatpush1.xpose.msra.mxu0 0.0
  %998 = vmatprep.subr.mxu0 0.0
  %999 = vmatpush1.xpose.msra.mxu0 0.0
  %1000 = vmatprep.subr.mxu0 0.0
  %1001 = vmatpush1.xpose.msra.mxu0 0.0
  %1002 = vmatprep.subr.mxu0 0.0
  %1003 = vmatpush1.xpose.msra.mxu0 0.0
  %1004 = vmatprep.subr.mxu0 0.0
  %1005 = vmatpush1.xpose.msra.mxu0 0.0
  %1006 = vmatprep.subr.mxu0 0.0
  %1007 = vmatpush1.xpose.msra.mxu0 0.0
  %1008 = vmatprep.subr.mxu0 0.0
  %1009 = vmatpush1.xpose.msra.mxu0 0.0
  %1010 = vmatprep.mubr.f32.mxu0 0.0
  %1011 = vmatmul.mubr.f32.gmra.mrb[0].mxu0 %v929
  %v1012 = vpop.f32.mrb[0].mxu0
  %v1013 = vadd.f32 0.0, %v1012
  %v1014 = vpop.f32.mrb[0].mxu0
  %1015 = vmatprep.mubr.f32.mxu0 0.0
  %1016 = vmatmul.mubr.f32.gmra.mrb[0].mxu0 %v932
  %v1017 = vpop.f32.mrb[0].mxu0
  %v1018 = vadd.f32 0.0, %v1017
  %v1019 = vpop.f32.mrb[0].mxu0
  %1020 = vdwg.mxu0
  %v1021 = vld [vmem:[%s3] sm:$0xff]
  %v1022 = vld [vmem:[%s3 + $0x8] sm:$0xff]
  %v1023 = vld [vmem:[%s3 + $0x10] sm:$0xff]
  %v1024 = vld [vmem:[%s3 + $0x18] sm:$0xff]
  %v1025 = vand.u32 2147483647, %v1013
  %v1026 = vand.u32 2147483647, %v1018
  %v1027 = vsub.f32 0.0, %v1025
  %v1028 = vsub.f32 0.0, %v1026
  %v1029 = vmul.f32 %v1027, 1.442695
  %v1030 = vpow.pop %v1029
  %v1031 = vmul.f32 %v1028, 1.442695
  %v1032 = vpow.pop %v1031
  %vm1033 = vcmp.ge.f32.partialorder %v1013, 0.0
  %vm1034 = vcmp.ge.f32.partialorder %v1018, 0.0
  %v1035 = vadd.f32 %v1030, 1.0
  %v1036 = vadd.f32 %v1032, 1.0
  %v1037 = vrcp.pop %v1035
  %v1038 = vmul.f32 1.0, %v1037
  %v1039 = vrcp.pop %v1036
  %v1040 = vmul.f32 1.0, %v1039
  %v1041 = vmul.f32 %v1030, %v1037
  %v1042 = vmul.f32 %v1032, %v1039
  %v1043 = vsel %vm1033, %v1038, %v1041
  %v1044 = vsel %vm1034, %v1040, %v1042
  %v1045 = vmax.f32 %v1013, 0.0
  %v1046 = vmax.f32 %v1018, 0.0
  %v1047 = vmul.f32 %v1013, %v1021
  %v1048 = vmul.f32 %v1018, %v1022
  %v1049 = vsub.f32 %v1045, %v1047
  %v1050 = vsub.f32 %v1046, %v1048
  %v1051 = vlog2.pop %v1035
  %v1052 = vmul.f32 %v1051, 0.6931472
  %v1053 = vlog2.pop %v1036
  %v1054 = vmul.f32 %v1053, 0.6931472
  %v1055 = vadd.f32 %v1049, %v1052
  %v1056 = vadd.f32 %v1050, %v1054
  %v1057 = vld [vmem:[%s5] sm:$0xff]
  %v1058 = vld [vmem:[%s5 + $0x8] sm:$0xff]
  %v1059 = vld [vmem:[%s5 + $0x10] sm:$0xff]
  %v1060 = vld [vmem:[%s5 + $0x18] sm:$0xff]
  %v1061 = vld [vmem:[%s5 + $0x20] sm:$0xff]
  %v1062 = vld [vmem:[%s5 + $0x28] sm:$0xff]
  %v1063 = vld [vmem:[%s5 + $0x30] sm:$0xff]
  %v1064 = vld [vmem:[%s5 + $0x38] sm:$0xff]
  %v1065 = vmul.f32 %v1055, %v1023
  %v1066 = vmul.f32 %v1056, %v1024
  %v1067 = vld [vmem:[%s5 + $0x40] sm:$0xff]
  %v1068 = vld [vmem:[%s5 + $0x48] sm:$0xff]
  %v1069 = vld [vmem:[%s5 + $0x50] sm:$0xff]
  %v1070 = vld [vmem:[%s5 + $0x58] sm:$0xff]
  %v1071 = vld [vmem:[%s5 + $0x60] sm:$0xff]
  %v1072 = vld [vmem:[%s5 + $0x68] sm:$0xff]
  %v1073 = vld [vmem:[%s5 + $0x70] sm:$0xff]
  %v1074 = vld [vmem:[%s5 + $0x78] sm:$0xff]
  %v1076 = vsel %vm94, %v1065, 0
  %v1079 = vsel %vm94, %v1066, 0
  %1081 = vmatprep.subr.mxu0 0.0
  %1082 = vmatpush1.msra.mxu0 %v1067
  %1083 = vmatprep.subr.mxu0 0.0
  %1084 = vmatpush1.msra.mxu0 %v1068
  %1085 = vmatprep.subr.mxu0 0.0
  %1086 = vmatpush1.msra.mxu0 %v1069
  %1087 = vmatprep.subr.mxu0 0.0
  %1088 = vmatpush1.msra.mxu0 %v1070
  %1089 = vmatprep.subr.mxu0 0.0
  %1090 = vmatpush1.msra.mxu0 %v1071
  %1091 = vmatprep.subr.mxu0 0.0
  %1092 = vmatpush1.msra.mxu0 %v1072
  %1093 = vmatprep.subr.mxu0 0.0
  %1094 = vmatpush1.msra.mxu0 %v1073
  %1095 = vmatprep.subr.mxu0 0.0
  %1096 = vmatpush1.msra.mxu0 %v1074
  %1097 = vmatprep.subr.mxu0 0.0
  %1098 = vmatpush1.msra.mxu0 0.0
  %1099 = vmatprep.subr.mxu0 0.0
  %1100 = vmatpush1.msra.mxu0 0.0
  %1101 = vmatprep.subr.mxu0 0.0
  %1102 = vmatpush1.msra.mxu0 0.0
  %1103 = vmatprep.subr.mxu0 0.0
  %1104 = vmatpush1.msra.mxu0 0.0
  %1105 = vmatprep.subr.mxu0 0.0
  %1106 = vmatpush1.msra.mxu0 0.0
  %1107 = vmatprep.subr.mxu0 0.0
  %1108 = vmatpush1.msra.mxu0 0.0
  %1109 = vmatprep.subr.mxu0 0.0
  %1110 = vmatpush1.msra.mxu0 0.0
  %1111 = vmatprep.subr.mxu0 0.0
  %1112 = vmatpush1.msra.mxu0 0.0
  %1113 = vmatprep.subr.mxu0 0.0
  %1114 = vmatpush1.msra.mxu0 0.0
  %1115 = vmatprep.subr.mxu0 0.0
  %1116 = vmatpush1.msra.mxu0 0.0
  %1117 = vmatprep.subr.mxu0 0.0
  %1118 = vmatpush1.msra.mxu0 0.0
  %1119 = vmatprep.subr.mxu0 0.0
  %1120 = vmatpush1.msra.mxu0 0.0
  %1121 = vmatprep.subr.mxu0 0.0
  %1122 = vmatpush1.msra.mxu0 0.0
  %1123 = vmatprep.subr.mxu0 0.0
  %1124 = vmatpush1.msra.mxu0 0.0
  %1125 = vmatprep.subr.mxu0 0.0
  %1126 = vmatpush1.msra.mxu0 0.0
  %1127 = vmatprep.subr.mxu0 0.0
  %1128 = vmatpush1.msra.mxu0 0.0
  %1129 = vmatprep.subr.mxu0 0.0
  %1130 = vmatpush1.msra.mxu0 0.0
  %1131 = vmatprep.subr.mxu0 0.0
  %1132 = vmatpush1.msra.mxu0 0.0
  %1133 = vmatprep.subr.mxu0 0.0
  %1134 = vmatpush1.msra.mxu0 0.0
  %1135 = vmatprep.subr.mxu0 0.0
  %1136 = vmatpush1.msra.mxu0 0.0
  %1137 = vmatprep.subr.mxu0 0.0
  %1138 = vmatpush1.msra.mxu0 0.0
  %1139 = vmatprep.subr.mxu0 0.0
  %1140 = vmatpush1.msra.mxu0 0.0
  %1141 = vmatprep.subr.mxu0 0.0
  %1142 = vmatpush1.msra.mxu0 0.0
  %1143 = vmatprep.subr.mxu0 0.0
  %1144 = vmatpush1.msra.mxu0 0.0
  %1145 = vmatprep.mubr.f32.mxu0 0.0
  %1146 = vmatmul.mubr.f32.gmra.mrb[0].mxu0 %v1076
  %v1147 = vpop.f32.mrb[0].mxu0
  %v1148 = vadd.f32 0.0, %v1147
  %v1149 = vpop.f32.mrb[0].mxu0
  %1150 = vmatprep.mubr.f32.mxu0 0.0
  %1151 = vmatmul.mubr.f32.gmra.mrb[0].mxu0 %v1079
  %v1152 = vpop.f32.mrb[0].mxu0
  %v1153 = vadd.f32 0.0, %v1152
  %v1154 = vpop.f32.mrb[0].mxu0
  %1155 = vdwg.mxu0
  %v1157 = vsel %vm94, %v1043, 0
  %v1160 = vsel %vm94, %v1044, 0
  %1162 = vmatprep.subr.mxu0 0.0
  %1163 = vmatpush1.msra.mxu0 %v1057
  %1164 = vmatprep.subr.mxu0 0.0
  %1165 = vmatpush1.msra.mxu0 %v1058
  %1166 = vmatprep.subr.mxu0 0.0
  %1167 = vmatpush1.msra.mxu0 %v1059
  %1168 = vmatprep.subr.mxu0 0.0
  %1169 = vmatpush1.msra.mxu0 %v1060
  %1170 = vmatprep.subr.mxu0 0.0
  %1171 = vmatpush1.msra.mxu0 %v1061
  %1172 = vmatprep.subr.mxu0 0.0
  %1173 = vmatpush1.msra.mxu0 %v1062
  %1174 = vmatprep.subr.mxu0 0.0
  %1175 = vmatpush1.msra.mxu0 %v1063
  %1176 = vmatprep.subr.mxu0 0.0
  %1177 = vmatpush1.msra.mxu0 %v1064
  %1178 = vmatprep.subr.mxu0 0.0
  %1179 = vmatpush1.msra.mxu0 0.0
  %1180 = vmatprep.subr.mxu0 0.0
  %1181 = vmatpush1.msra.mxu0 0.0
  %1182 = vmatprep.subr.mxu0 0.0
  %1183 = vmatpush1.msra.mxu0 0.0
  %1184 = vmatprep.subr.mxu0 0.0
  %1185 = vmatpush1.msra.mxu0 0.0
  %1186 = vmatprep.subr.mxu0 0.0
  %1187 = vmatpush1.msra.mxu0 0.0
  %1188 = vmatprep.subr.mxu0 0.0
  %1189 = vmatpush1.msra.mxu0 0.0
  %1190 = vmatprep.subr.mxu0 0.0
  %1191 = vmatpush1.msra.mxu0 0.0
  %1192 = vmatprep.subr.mxu0 0.0
  %1193 = vmatpush1.msra.mxu0 0.0
  %1194 = vmatprep.subr.mxu0 0.0
  %1195 = vmatpush1.msra.mxu0 0.0
  %1196 = vmatprep.subr.mxu0 0.0
  %1197 = vmatpush1.msra.mxu0 0.0
  %1198 = vmatprep.subr.mxu0 0.0
  %1199 = vmatpush1.msra.mxu0 0.0
  %1200 = vmatprep.subr.mxu0 0.0
  %1201 = vmatpush1.msra.mxu0 0.0
  %1202 = vmatprep.subr.mxu0 0.0
  %1203 = vmatpush1.msra.mxu0 0.0
  %1204 = vmatprep.subr.mxu0 0.0
  %1205 = vmatpush1.msra.mxu0 0.0
  %1206 = vmatprep.subr.mxu0 0.0
  %1207 = vmatpush1.msra.mxu0 0.0
  %1208 = vmatprep.subr.mxu0 0.0
  %1209 = vmatpush1.msra.mxu0 0.0
  %1210 = vmatprep.subr.mxu0 0.0
  %1211 = vmatpush1.msra.mxu0 0.0
  %1212 = vmatprep.subr.mxu0 0.0
  %1213 = vmatpush1.msra.mxu0 0.0
  %1214 = vmatprep.subr.mxu0 0.0
  %1215 = vmatpush1.msra.mxu0 0.0
  %1216 = vmatprep.subr.mxu0 0.0
  %1217 = vmatpush1.msra.mxu0 0.0
  %1218 = vmatprep.subr.mxu0 0.0
  %1219 = vmatpush1.msra.mxu0 0.0
  %1220 = vmatprep.subr.mxu0 0.0
  %1221 = vmatpush1.msra.mxu0 0.0
  %1222 = vmatprep.subr.mxu0 0.0
  %1223 = vmatpush1.msra.mxu0 0.0
  %1224 = vmatprep.subr.mxu0 0.0
  %1225 = vmatpush1.msra.mxu0 0.0
  %1226 = vmatprep.mubr.f32.mxu0 0.0
  %1227 = vmatmul.mubr.f32.gmra.mrb[0].mxu0 %v1157
  %v1228 = vpop.f32.mrb[0].mxu0
  %v1229 = vadd.f32 %v1148, %v1228
  %v1230 = vpop.f32.mrb[0].mxu0
  %1231 = vmatprep.mubr.f32.mxu0 0.0
  %1232 = vmatmul.mubr.f32.gmra.mrb[0].mxu0 %v1160
  %v1233 = vpop.f32.mrb[0].mxu0
  %v1234 = vadd.f32 %v1153, %v1233
  %v1235 = vpop.f32.mrb[0].mxu0
  %1236 = vdwg.mxu0
  %1237 = vst [vmem:[%s8] sm:$0xff] %v1229
  %1238 = vst [vmem:[%s8 + $0x8] sm:$0xff] %v1234
  // Predicated region
  $region34: #{forward.1} parent=0 // pred_check
    _
  $region35: #{forward.1} parent=0 // pred_check_branch
    %1240 = sbr.rel (0) target = $region37
  $region36: #{forward.1} parent=0 // pred_region
    _
  $region37: #{forward.1} parent=0 // pred_fallthru
    _
  // Predicated region
  $region38: #{forward.1} parent=0 // pred_check
    _
  $region39: #{forward.1} parent=0 // pred_check_branch
    %1242 = sbr.rel (0) target = $region41
  $region40: #{forward.1} parent=0 // pred_region
    _
  $region41: #{forward.1} parent=0 // pred_fallthru
    _

</llo_original>
